<compile_context>
chip_gen: v7x
topology: tpu7x:2x2x1
jax: 0.10.0
libtpu: 0.0.40
codegen_flags: <defaults>
</compile_context>

<pallas_src>
import functools

import jax
import jax.numpy as jnp
from jax.experimental import pallas as pl
from jax.experimental.pallas import tpu as pltpu

_C1 = 0.01 ** 2
_C2 = 0.03 ** 2


def _reflect_matrix(w):
    """W x W matrix M with (a @ M)[:, j] = a[:, j-1] + a[:, j] + a[:, j+1],
    using ReflectionPad2d(1) semantics at the left/right borders."""
    i = jax.lax.broadcasted_iota(jnp.int32, (w, w), 0)
    j = jax.lax.broadcasted_iota(jnp.int32, (w, w), 1)
    near = (jnp.abs(i - j) <= 1).astype(jnp.float32)
    extra = (((i == 1) & (j == 0)) | ((i == w - 2) & (j == w - 1))).astype(jnp.float32)
    return near + extra


def _ssim_kernel(x_ref, y_ref, o_ref, *, H):
    # x_ref / y_ref / o_ref: (R, W) blocks where R = TN * H whole image planes
    # stacked along the sublane axis.
    x = x_ref[...].astype(jnp.float32)
    y = y_ref[...].astype(jnp.float32)
    R, W = x.shape
    S = 5 * R

    # Stack the five quantities to pool on the sublane axis: the whole
    # separable 3x3 average pool is then issued once on a (5R, W) slab.
    q = jnp.concatenate([x, y, x * x, y * y, x * y], axis=0)

    row = jax.lax.broadcasted_iota(jnp.int32, (S, W), 0)
    rm = row % H                       # row index within its own (b, c) plane
    first_row = rm == 0
    last_row = rm == (H - 1)

    # ---- vertical 3-tap (sublane axis), ReflectionPad2d(1) per plane ----
    up = jnp.concatenate([q[:1], q[:-1]], axis=0)    # up[r] = q[r-1]   (r > 0)
    dn = jnp.concatenate([q[1:], q[-1:]], axis=0)    # dn[r] = q[r+1]   (r < S-1)
    up = jnp.where(first_row, dn, up)                # reflect: row -1 -> row +1
    dn = jnp.where(last_row, up, dn)                 # reflect: row H  -> row H-2
    cs = up + q + dn

    # ---- horizontal 3-tap (lane axis), reflect at image borders ----
    if W % 128 == 0:
        col = jax.lax.broadcasted_iota(jnp.int32, (S, W), 1)
        lf = pltpu.roll(cs, shift=1, axis=1)         # lf[:, j] = cs[:, j-1]
        rt = pltpu.roll(cs, shift=-1, axis=1)        # rt[:, j] = cs[:, j+1]
        lf = jnp.where(col == 0, rt, lf)             # col -1 -> col 1
        rt = jnp.where(col == W - 1, lf, rt)         # col W  -> col W-2
        pooled = (lf + cs + rt) * (1.0 / 9.0)
    else:
        # Small / unaligned W: one tiny matmul against a constant reflect
        # matrix on the otherwise idle MXU (no unaligned lane shifts).
        refl_m = _reflect_matrix(W)
        pooled = jnp.dot(cs, refl_m, preferred_element_type=jnp.float32) * (1.0 / 9.0)

    mu_x = pooled[0 * R:1 * R]
    mu_y = pooled[1 * R:2 * R]
    e_xx = pooled[2 * R:3 * R]
    e_yy = pooled[3 * R:4 * R]
    e_xy = pooled[4 * R:5 * R]

    mu_x2 = mu_x * mu_x
    mu_y2 = mu_y * mu_y
    mu_xy = mu_x * mu_y
    sigma_x = e_xx - mu_x2
    sigma_y = e_yy - mu_y2
    sigma_xy = e_xy - mu_xy

    ssim_n = (2.0 * mu_xy + _C1) * (2.0 * sigma_xy + _C2)
    ssim_d = (mu_x2 + mu_y2 + _C1) * (sigma_x + sigma_y + _C2)

    inv_d = pl.reciprocal(ssim_d, approx=True)
    inv_d = inv_d * (2.0 - ssim_d * inv_d)     # one Newton step -> ~f32-exact
    out = (1.0 - ssim_n * inv_d) * 0.5
    o_ref[...] = jnp.clip(out, 0.0, 1.0).astype(o_ref.dtype)


def _pick_tn(N, H, W, in_itemsize, out_itemsize):
    """Planes per grid step: as big as a conservative VMEM budget allows."""
    # double-buffered input/output blocks + headroom for the in-kernel f32
    # temporaries (the 5x-stacked slab and its shifted copies).
    per_plane = H * W * (4 * in_itemsize + 2 * out_itemsize + 40 * 4)
    cap = max(1, (16 * 1024 * 1024) // per_plane)
    if N >= 2:
        cap = min(cap, N // 2)   # keep >= 2 grid steps so v7x can use both TCs
    cap = max(cap, 1)
    best = 0
    for t in range(1, N + 1):
        if N % t == 0 and t <= cap and (t * H) % 8 == 0:
            best = t
    if best == 0:
        # No sublane-aligned tile found; fall back to one full-array block
        # (block shape == array shape is always legal).
        best = N
    return best


def ssim_loss(image1, image2):
    """SSIM loss map matching the PyTorch SSIM module forward.

    image1, image2: [B, C, H, W]. Returns [B, C, H, W] in image1's dtype.
    """
    B, C, H, W = image1.shape
    assert H >= 2 and W >= 2, "ReflectionPad2d(1) requires spatial dims >= 2"
    N = B * C
    out_dtype = image1.dtype

    # Free layout change (no HBM copy): stack all planes on the sublane axis.
    x = image1.reshape(N * H, W)
    y = image2.reshape(N * H, W)

    tn = _pick_tn(N, H, W, x.dtype.itemsize, jnp.dtype(out_dtype).itemsize)
    r_blk = tn * H

    out = pl.pallas_call(
        functools.partial(_ssim_kernel, H=H),
        out_shape=jax.ShapeDtypeStruct((N * H, W), out_dtype),
        grid_spec=pl.GridSpec(
            grid=(N // tn,),
            in_specs=[
                pl.BlockSpec((r_blk, W), lambda i: (i, 0)),
                pl.BlockSpec((r_blk, W), lambda i: (i, 0)),
            ],
            out_specs=pl.BlockSpec((r_blk, W), lambda i: (i, 0)),
        ),
        compiler_params=pltpu.CompilerParams(
            dimension_semantics=("parallel",),
            vmem_limit_bytes=32 * 1024 * 1024,
        ),
    )(x, y)

    return out.reshape(B, C, H, W)


def _ssim_ref(x, y):
    """Pure-JAX reference matching the PyTorch module (for self-check)."""
    def pool(a):
        ap = jnp.pad(a, ((0, 0), (0, 0), (1, 1), (1, 1)), mode="reflect")
        H, W = a.shape[2], a.shape[3]
        s = sum(ap[:, :, i:i + H, j:j + W] for i in range(3) for j in range(3))
        return s / 9.0
    mu_x, mu_y = pool(x), pool(y)
    sx = pool(x * x) - mu_x ** 2
    sy = pool(y * y) - mu_y ** 2
    sxy = pool(x * y) - mu_x * mu_y
    n = (2 * mu_x * mu_y + _C1) * (2 * sxy + _C2)
    d = (mu_x ** 2 + mu_y ** 2 + _C1) * (sx + sy + _C2)
    return jnp.clip((1 - n / d) / 2, 0.0, 1.0)


if __name__ == "__main__":
    key = jax.random.PRNGKey(0)
    k1, k2 = jax.random.split(key)
    # Small shapes consistent with the module's forward (NCHW images).
    image1 = jax.random.uniform(k1, (2, 4, 16, 16), dtype=jnp.float32)
    image2 = jax.random.uniform(k2, (2, 4, 16, 16), dtype=jnp.float32)

    result = ssim_loss(image1, image2)
    jax.block_until_ready(result)
    assert result.shape == (2, 4, 16, 16)

    ref = _ssim_ref(image1, image2)
    err = float(jnp.max(jnp.abs(result.astype(jnp.float32) - ref)))
    assert err < 1e-4, f"max abs error {err}"
    print("KERNEL_OK")
</pallas_src>

<mosaic_0001>
module attributes {stable_mosaic.version = 11 : i64} {
  func.func @_ssim_kernel(%arg0: i32, %arg1: memref<64x16xf32, #tpu.memory_space<vmem>>, %arg2: memref<64x16xf32, #tpu.memory_space<vmem>>, %arg3: memref<64x16xf32, #tpu.memory_space<vmem>>) attributes {dimension_semantics = [#tpu.dimension_semantics<parallel>], iteration_bounds = array<i64: 2>, scalar_prefetch = 0 : i64, scratch_operands = 0 : i64, tpu.core_type = #tpu.core_type<tc>, window_params = [{transform_indices = @transform_0, window_bounds = array<i64: 64, 16>}, {transform_indices = @transform_1, window_bounds = array<i64: 64, 16>}, {transform_indices = @transform_2, window_bounds = array<i64: 64, 16>}]} {
    %c0 = arith.constant 0 : index
    %c0_0 = arith.constant 0 : index
    %0 = vector.load %arg1[%c0, %c0_0] : memref<64x16xf32, #tpu.memory_space<vmem>>, vector<64x16xf32>
    %c0_1 = arith.constant 0 : index
    %c0_2 = arith.constant 0 : index
    %1 = vector.load %arg2[%c0_1, %c0_2] : memref<64x16xf32, #tpu.memory_space<vmem>>, vector<64x16xf32>
    %2 = arith.mulf %0, %0 : vector<64x16xf32>
    %3 = arith.mulf %1, %1 : vector<64x16xf32>
    %4 = arith.mulf %0, %1 : vector<64x16xf32>
    %5 = tpu.concatenate %0, %1, %2, %3, %4 in 0 : vector<64x16xf32>, vector<64x16xf32>, vector<64x16xf32>, vector<64x16xf32>, vector<64x16xf32> -> vector<320x16xf32>
    %6 = tpu.iota {dimensions = array<i32: 0>} : vector<320x16xi32>
    %c16_i32 = arith.constant 16 : i32
    %c0_i32 = arith.constant 0 : i32
    %7 = arith.cmpi eq, %c16_i32, %c0_i32 : i32
    %c1_i32 = arith.constant 1 : i32
    %8 = arith.select %7, %c1_i32, %c16_i32 : i32
    %9 = vector.broadcast %8 : i32 to vector<320x16xi32>
    %10 = arith.remsi %6, %9 : vector<320x16xi32>
    %c0_i32_3 = arith.constant 0 : i32
    %11 = vector.broadcast %c0_i32_3 : i32 to vector<320x16xi32>
    %12 = arith.cmpi ne, %10, %11 : vector<320x16xi32>
    %c0_i32_4 = arith.constant 0 : i32
    %13 = vector.broadcast %c0_i32_4 : i32 to vector<320x16xi32>
    %14 = arith.cmpi slt, %10, %13 : vector<320x16xi32>
    %c0_i32_5 = arith.constant 0 : i32
    %15 = arith.cmpi slt, %8, %c0_i32_5 : i32
    %16 = vector.broadcast %15 : i1 to vector<320x16xi1>
    %17 = vector.broadcast %16 : vector<320x16xi1> to vector<320x16xi1>
    %18 = arith.xori %14, %17 : vector<320x16xi1>
    %19 = arith.andi %18, %12 : vector<320x16xi1>
    %20 = vector.broadcast %8 : i32 to vector<320x16xi32>
    %21 = arith.addi %10, %20 : vector<320x16xi32>
    %22 = arith.select %19, %21, %10 : vector<320x16xi1>, vector<320x16xi32>
    %c0_i32_6 = arith.constant 0 : i32
    %23 = vector.broadcast %c0_i32_6 : i32 to vector<320x16xi32>
    %24 = arith.cmpi eq, %22, %23 : vector<320x16xi32>
    %c15_i32 = arith.constant 15 : i32
    %25 = vector.broadcast %c15_i32 : i32 to vector<320x16xi32>
    %26 = arith.cmpi eq, %22, %25 : vector<320x16xi32>
    %27 = vector.extract_strided_slice %5 {offsets = [0, 0], sizes = [1, 16], strides = [1, 1]} : vector<320x16xf32> to vector<1x16xf32>
    %28 = vector.extract_strided_slice %5 {offsets = [0, 0], sizes = [319, 16], strides = [1, 1]} : vector<320x16xf32> to vector<319x16xf32>
    %29 = tpu.concatenate %27, %28 in 0 : vector<1x16xf32>, vector<319x16xf32> -> vector<320x16xf32>
    %30 = vector.extract_strided_slice %5 {offsets = [1, 0], sizes = [319, 16], strides = [1, 1]} : vector<320x16xf32> to vector<319x16xf32>
    %31 = vector.extract_strided_slice %5 {offsets = [319, 0], sizes = [1, 16], strides = [1, 1]} : vector<320x16xf32> to vector<1x16xf32>
    %32 = tpu.concatenate %30, %31 in 0 : vector<319x16xf32>, vector<1x16xf32> -> vector<320x16xf32>
    %33 = arith.select %24, %32, %29 : vector<320x16xi1>, vector<320x16xf32>
    %34 = arith.select %26, %33, %32 : vector<320x16xi1>, vector<320x16xf32>
    %35 = arith.addf %33, %5 : vector<320x16xf32>
    %36 = arith.addf %35, %34 : vector<320x16xf32>
    %37 = tpu.iota {dimensions = array<i32: 0>} : vector<16x16xi32>
    %38 = tpu.iota {dimensions = array<i32: 1>} : vector<16x16xi32>
    %39 = arith.subi %37, %38 : vector<16x16xi32>
    %40 = math.absi %39 : vector<16x16xi32>
    %c1_i32_7 = arith.constant 1 : i32
    %41 = vector.broadcast %c1_i32_7 : i32 to vector<16x16xi32>
    %42 = arith.cmpi sle, %40, %41 : vector<16x16xi32>
    %43 = arith.extui %42 : vector<16x16xi1> to vector<16x16xi32>
    %44 = arith.sitofp %43 : vector<16x16xi32> to vector<16x16xf32>
    %c1_i32_8 = arith.constant 1 : i32
    %45 = vector.broadcast %c1_i32_8 : i32 to vector<16x16xi32>
    %46 = arith.cmpi eq, %37, %45 : vector<16x16xi32>
    %c0_i32_9 = arith.constant 0 : i32
    %47 = vector.broadcast %c0_i32_9 : i32 to vector<16x16xi32>
    %48 = arith.cmpi eq, %38, %47 : vector<16x16xi32>
    %49 = arith.andi %46, %48 : vector<16x16xi1>
    %c14_i32 = arith.constant 14 : i32
    %50 = vector.broadcast %c14_i32 : i32 to vector<16x16xi32>
    %51 = arith.cmpi eq, %37, %50 : vector<16x16xi32>
    %c15_i32_10 = arith.constant 15 : i32
    %52 = vector.broadcast %c15_i32_10 : i32 to vector<16x16xi32>
    %53 = arith.cmpi eq, %38, %52 : vector<16x16xi32>
    %54 = arith.andi %51, %53 : vector<16x16xi1>
    %55 = arith.ori %49, %54 : vector<16x16xi1>
    %56 = arith.extui %55 : vector<16x16xi1> to vector<16x16xi32>
    %57 = arith.sitofp %56 : vector<16x16xi32> to vector<16x16xf32>
    %58 = arith.addf %44, %57 : vector<16x16xf32>
    %cst = arith.constant dense<0.000000e+00> : vector<320x16xf32>
    %59 = tpu.matmul %36, %58, %cst {dimension_numbers = #tpu.dot_dimension_numbers<[1], [0], [0], [1], [0, 0, 1, 1], [], []>} : vector<320x16xf32>, vector<16x16xf32>, vector<320x16xf32> -> vector<320x16xf32>
    %cst_11 = arith.constant 0.111111112 : f32
    %60 = vector.broadcast %cst_11 : f32 to vector<320x16xf32>
    %61 = arith.mulf %59, %60 : vector<320x16xf32>
    %62 = vector.extract_strided_slice %61 {offsets = [0, 0], sizes = [64, 16], strides = [1, 1]} : vector<320x16xf32> to vector<64x16xf32>
    %63 = vector.extract_strided_slice %61 {offsets = [64, 0], sizes = [64, 16], strides = [1, 1]} : vector<320x16xf32> to vector<64x16xf32>
    %64 = vector.extract_strided_slice %61 {offsets = [128, 0], sizes = [64, 16], strides = [1, 1]} : vector<320x16xf32> to vector<64x16xf32>
    %65 = vector.extract_strided_slice %61 {offsets = [192, 0], sizes = [64, 16], strides = [1, 1]} : vector<320x16xf32> to vector<64x16xf32>
    %66 = vector.extract_strided_slice %61 {offsets = [256, 0], sizes = [64, 16], strides = [1, 1]} : vector<320x16xf32> to vector<64x16xf32>
    %67 = arith.mulf %62, %62 : vector<64x16xf32>
    %68 = arith.mulf %63, %63 : vector<64x16xf32>
    %69 = arith.mulf %62, %63 : vector<64x16xf32>
    %70 = arith.subf %64, %67 : vector<64x16xf32>
    %71 = arith.subf %65, %68 : vector<64x16xf32>
    %72 = arith.subf %66, %69 : vector<64x16xf32>
    %cst_12 = arith.constant 2.000000e+00 : f32
    %73 = vector.broadcast %cst_12 : f32 to vector<64x16xf32>
    %74 = arith.mulf %73, %69 : vector<64x16xf32>
    %cst_13 = arith.constant 9.99999974E-5 : f32
    %75 = vector.broadcast %cst_13 : f32 to vector<64x16xf32>
    %76 = arith.addf %74, %75 : vector<64x16xf32>
    %cst_14 = arith.constant 2.000000e+00 : f32
    %77 = vector.broadcast %cst_14 : f32 to vector<64x16xf32>
    %78 = arith.mulf %77, %72 : vector<64x16xf32>
    %cst_15 = arith.constant 8.99999984E-4 : f32
    %79 = vector.broadcast %cst_15 : f32 to vector<64x16xf32>
    %80 = arith.addf %78, %79 : vector<64x16xf32>
    %81 = arith.mulf %76, %80 : vector<64x16xf32>
    %82 = arith.addf %67, %68 : vector<64x16xf32>
    %cst_16 = arith.constant 9.99999974E-5 : f32
    %83 = vector.broadcast %cst_16 : f32 to vector<64x16xf32>
    %84 = arith.addf %82, %83 : vector<64x16xf32>
    %85 = arith.addf %70, %71 : vector<64x16xf32>
    %cst_17 = arith.constant 8.99999984E-4 : f32
    %86 = vector.broadcast %cst_17 : f32 to vector<64x16xf32>
    %87 = arith.addf %85, %86 : vector<64x16xf32>
    %88 = arith.mulf %84, %87 : vector<64x16xf32>
    %89 = tpu.reciprocal %88 {approx = true} : vector<64x16xf32> -> vector<64x16xf32>
    %90 = arith.mulf %88, %89 : vector<64x16xf32>
    %cst_18 = arith.constant 2.000000e+00 : f32
    %91 = vector.broadcast %cst_18 : f32 to vector<64x16xf32>
    %92 = arith.subf %91, %90 : vector<64x16xf32>
    %93 = arith.mulf %89, %92 : vector<64x16xf32>
    %94 = arith.mulf %81, %93 : vector<64x16xf32>
    %cst_19 = arith.constant 1.000000e+00 : f32
    %95 = vector.broadcast %cst_19 : f32 to vector<64x16xf32>
    %96 = arith.subf %95, %94 : vector<64x16xf32>
    %cst_20 = arith.constant 5.000000e-01 : f32
    %97 = vector.broadcast %cst_20 : f32 to vector<64x16xf32>
    %98 = arith.mulf %96, %97 : vector<64x16xf32>
    %cst_21 = arith.constant 0.000000e+00 : f32
    %cst_22 = arith.constant 1.000000e+00 : f32
    %99 = vector.broadcast %cst_21 : f32 to vector<64x16xf32>
    %100 = arith.maximumf %99, %98 : vector<64x16xf32>
    %101 = vector.broadcast %cst_22 : f32 to vector<64x16xf32>
    %102 = arith.minimumf %101, %100 : vector<64x16xf32>
    %c0_23 = arith.constant 0 : index
    %c0_24 = arith.constant 0 : index
    %103 = vector.load %arg3[%c0_23, %c0_24] : memref<64x16xf32, #tpu.memory_space<vmem>>, vector<64x16xf32>
    tpu.vector_store %arg3[%c0_23, %c0_24], %102 {strides = array<i32>} : memref<64x16xf32, #tpu.memory_space<vmem>>, vector<64x16xf32>,
    return
  }
  func.func @transform_0(%arg0: i32) -> (i32, i32) {
    %c0_i32 = arith.constant 0 : i32
    %c0_i32_0 = arith.constant 0 : i32
    return %arg0, %c0_i32 : i32, i32
  }
  func.func @transform_1(%arg0: i32) -> (i32, i32) {
    %c0_i32 = arith.constant 0 : i32
    %c0_i32_0 = arith.constant 0 : i32
    return %arg0, %c0_i32 : i32, i32
  }
  func.func @transform_2(%arg0: i32) -> (i32, i32) {
    %c0_i32 = arith.constant 0 : i32
    %c0_i32_0 = arith.constant 0 : i32
    return %arg0, %c0_i32 : i32, i32
  }
}

</mosaic_0001>

<llo_original>
// kernel: tpu_custom_call.1
$region0: #{tpu_custom_call.1}
  #allocation0 [shape = 'u32[]', space=smem, size = 0x4, offset = 0x4, fixed_abs, tag = 'smem constant byte address 0x4 - core index']
  #allocation1 [shape = 'u32[144,128]{1,0:T(1,128)}', space=vmem, size = 0x12000, scoped, tag = 'internal scratch']
  %s0 = inlined_call_operand.vmem [shape: f32[128,16], index: 0, kind: input, shape index: {}]
  %s1 = inlined_call_operand.vmem [shape: f32[128,16], index: 1, kind: input, shape index: {}]
  %s2 = inlined_call_operand.vmem [shape: f32[128,16], index: 2, kind: output, shape index: {}]
  %s3 = sld [smem:[#allocation0]]
  $region41: #{tpu_custom_call.1} parent=0
    _
  %s5 = ssub.s32 1, %s3
  %s6 = scalar_select 0, %s5, %s3
  loop: start=0, step=1, limit=4
  $region2: #{tpu_custom_call.1} parent=0 // loop_pre_header
    _
  $region3: #{tpu_custom_call.1} parent=0 // loop_header
    %s8 = sphi 0, %s12
    %p9 = scmp.ge.s32.totalorder %s8, 4
    %s18 = sphi 0, %s20
    %s21 = sphi 0, %s18
    %s22 = sphi 0, %s21
    %s38 = sphi 0, %s22
    %s44 = sphi 0, %s46
    %s47 = sphi 0, %s44
    %s48 = sphi 0, %s47
    %s64 = sphi 0, %s48
    %s70 = sphi 0, %s72
    %s73 = sphi 0, %s70
    %s74 = sphi 0, %s73
    %s90 = sphi 0, %s74
  $region4: #{tpu_custom_call.1} parent=0 // loop_header_branch
    %11 = sbr.rel (%p9) target = $region8
  $region5: #{tpu_custom_call.1} parent=0 // loop_body
    %s13 = ssub.s32 %s8, 1
    %s14 = ssub.s32 %s8, 2
    %s15 = sadd.s32 %s8, 1
    %s16 = ssub.s32 %s8, %s15
    %p17 = scmp.eq.s32.totalorder %s16, 0
    %s19 = sadd.s32 %s18, 1
    %s20 = scalar_select %p17, %s18, %s19
    %p23 = pneg %p17
    %p24 = scmp.eq.s32.totalorder %s8, 1
    %p25 = por %p23, %p24
    %p26 = scmp.ne.s32.totalorder %s18, %s21
    %p27 = scmp.eq.s32.totalorder %s8, 0
    %p28 = por %p26, %p27
    %p29 = scmp.ne.s32.totalorder %s18, %s21
    %p30 = scmp.eq.s32.totalorder %s13, 1
    %p31 = por %p29, %p30
    %p32 = scmp.ne.s32.totalorder %s21, %s22
    %p33 = scmp.eq.s32.totalorder %s13, 0
    %p34 = por %p32, %p33
    %p35 = scmp.ne.s32.totalorder %s21, %s22
    %p36 = scmp.eq.s32.totalorder %s14, 1
    %p37 = por %p35, %p36
    %p39 = scmp.ne.s32.totalorder %s22, %s38
    %p40 = scmp.eq.s32.totalorder %s14, 0
    %p41 = por %p39, %p40
    %s42 = ssub.s32 %s8, %s15
    %p43 = scmp.eq.s32.totalorder %s42, 0
    %s45 = sadd.s32 %s44, 1
    %s46 = scalar_select %p43, %s44, %s45
    %p49 = pneg %p43
    %p50 = scmp.eq.s32.totalorder %s8, 1
    %p51 = por %p49, %p50
    %p52 = scmp.ne.s32.totalorder %s44, %s47
    %p53 = scmp.eq.s32.totalorder %s8, 0
    %p54 = por %p52, %p53
    %p55 = scmp.ne.s32.totalorder %s44, %s47
    %p56 = scmp.eq.s32.totalorder %s13, 1
    %p57 = por %p55, %p56
    %p58 = scmp.ne.s32.totalorder %s47, %s48
    %p59 = scmp.eq.s32.totalorder %s13, 0
    %p60 = por %p58, %p59
    %p61 = scmp.ne.s32.totalorder %s47, %s48
    %p62 = scmp.eq.s32.totalorder %s14, 1
    %p63 = por %p61, %p62
    %p65 = scmp.ne.s32.totalorder %s48, %s64
    %p66 = scmp.eq.s32.totalorder %s14, 0
    %p67 = por %p65, %p66
    %s68 = ssub.s32 %s8, %s15
    %p69 = scmp.eq.s32.totalorder %s68, 0
    %s71 = sadd.s32 %s70, 1
    %s72 = scalar_select %p69, %s70, %s71
    %p75 = pneg %p69
    %p76 = scmp.eq.s32.totalorder %s8, 1
    %p77 = por %p75, %p76
    %p78 = scmp.ne.s32.totalorder %s70, %s73
    %p79 = scmp.eq.s32.totalorder %s8, 0
    %p80 = por %p78, %p79
    %p81 = scmp.ne.s32.totalorder %s70, %s73
    %p82 = scmp.eq.s32.totalorder %s13, 1
    %p83 = por %p81, %p82
    %p84 = scmp.ne.s32.totalorder %s73, %s74
    %p85 = scmp.eq.s32.totalorder %s13, 0
    %p86 = por %p84, %p85
    %p87 = scmp.ne.s32.totalorder %s73, %s74
    %p88 = scmp.eq.s32.totalorder %s14, 1
    %p89 = por %p87, %p88
    %p91 = scmp.ne.s32.totalorder %s74, %s90
    %p92 = scmp.eq.s32.totalorder %s14, 0
    %p93 = por %p91, %p92
    %p94 = scmp.le.s32.totalorder 1, %s8
    %p95 = scmp.lt.s32.totalorder %s8, 3
    %p96 = pnand %p94, %p95
    %p97 = pneg %p96
    // Predicated region
    $region9: #{tpu_custom_call.1} parent=5 // pred_check
      _
    $region10: #{tpu_custom_call.1} parent=5 // pred_check_branch
      %99 = sbr.rel (%p96) target = $region12
    $region11: #{tpu_custom_call.1} parent=5 // pred_region
      %s100 = ssub.s32 %s8, 1
    $region12: #{tpu_custom_call.1} parent=5 // pred_fallthru
      _
    %p101 = scmp.lt.s32.totalorder %s8, 2
    // Predicated region
    $region13: #{tpu_custom_call.1} parent=5 // pred_check
      %p102 = pneg %p101
    $region14: #{tpu_custom_call.1} parent=5 // pred_check_branch
      %104 = sbr.rel (%p102) target = $region16
    $region15: #{tpu_custom_call.1} parent=5 // pred_region
      // Predicated region
      $region17: #{tpu_custom_call.1} parent=15 // pred_check
        %p105 = pneg %p28
      $region18: #{tpu_custom_call.1} parent=15 // pred_check_branch
        %107 = sbr.rel (%p105) target = $region20
      $region19: #{tpu_custom_call.1} parent=15 // pred_region
        %s108 = smul.u32 8, %s8
        %p109 = scmp.lt.s32.totalorder %s108, 15
        %s110 = scalar_select %p109, %s108, 15
        %s111 = smul.addr %s110, 8
        %s112 = scalar_lea.vmem %s0, %s111
        %s113 = smul.u32 8, %s8
      $region20: #{tpu_custom_call.1} parent=15 // pred_fallthru
        _
      // Predicated region
      $region21: #{tpu_custom_call.1} parent=15 // pred_check
        %p114 = pneg %p54
      $region22: #{tpu_custom_call.1} parent=15 // pred_check_branch
        %116 = sbr.rel (%p114) target = $region24
      $region23: #{tpu_custom_call.1} parent=15 // pred_region
        %s117 = smul.u32 8, %s8
        %p118 = scmp.lt.s32.totalorder %s117, 15
        %s119 = scalar_select %p118, %s117, 15
        %s120 = smul.addr %s119, 8
        %s121 = scalar_lea.vmem %s1, %s120
        %s122 = smul.u32 8, %s8
      $region24: #{tpu_custom_call.1} parent=15 // pred_fallthru
        _
    $region16: #{tpu_custom_call.1} parent=5 // pred_fallthru
      _
    %p123 = scmp.le.s32.totalorder 1, %s8
    %p124 = scmp.lt.s32.totalorder %s8, 3
    %p125 = pnand %p123, %p124
    %p126 = pneg %p125
    // Predicated region
    $region25: #{tpu_custom_call.1} parent=5 // pred_check
      _
    $region26: #{tpu_custom_call.1} parent=5 // pred_check_branch
      %128 = sbr.rel (%p125) target = $region28
    $region27: #{tpu_custom_call.1} parent=5 // pred_region
      %s129 = ssub.s32 %s8, 1
      %s130 = smul.u32 8, %s13
      %p131 = scmp.lt.s32.totalorder %s130, 15
      %s132 = scalar_select %p131, %s130, 15
      %s133 = smul.addr %s132, 8
      %s134 = scalar_lea.vmem %s0, %s133
      %p135 = pneg %p34
      %p136 = pneg %p31
      %s137 = smul.u32 8, %s13
      %p138 = scmp.lt.s32.totalorder %s137, 15
      %s139 = scalar_select %p138, %s137, 15
      %s140 = smul.addr %s139, 8
      %s141 = scalar_lea.vmem %s1, %s140
      %p142 = pneg %p60
      %p143 = pneg %p57
      %p144 = pneg %p86
      %p145 = pneg %p83
      %s146 = smul.u32 8, %s13
      %p147 = scmp.lt.s32.totalorder %s146, 15
      %s148 = scalar_select %p147, %s146, 15
      %s149 = smul.addr %s148, 8
      %s150 = scalar_lea.vmem %s2, %s149
      %s151 = smul.u32 8, %s13
      %p152 = scmp.lt.s32.totalorder %s151, 15
      %s153 = scalar_select %p152, %s151, 15
      %s154 = smul.addr %s153, 8
      %s155 = scalar_lea.vmem %s0, %s154
      %s156 = smul.u32 8, %s13
      %s157 = smul.u32 8, %s13
      %p158 = scmp.lt.s32.totalorder %s157, 15
      %s159 = scalar_select %p158, %s157, 15
      %s160 = smul.addr %s159, 8
      %s161 = scalar_lea.vmem %s1, %s160
      %s162 = smul.u32 8, %s13
      %s163 = smul.u32 8, %s13
      %p164 = scmp.lt.s32.totalorder %s163, 15
      %s165 = scalar_select %p164, %s163, 15
      %s166 = smul.addr %s165, 8
      %s167 = scalar_lea.vmem %s2, %s166
      %s168 = smul.u32 8, %s13
      %v169 = vld [vmem:[%s155] sm:$0xff]
      %v170 = vld [vmem:[%s155 + $0x8] sm:$0xff]
      %v171 = vld [vmem:[%s155 + $0x10] sm:$0xff]
      %v172 = vld [vmem:[%s155 + $0x18] sm:$0xff]
      %v173 = vld [vmem:[%s155 + $0x20] sm:$0xff]
      %v174 = vld [vmem:[%s155 + $0x28] sm:$0xff]
      %v175 = vld [vmem:[%s155 + $0x30] sm:$0xff]
      %v176 = vld [vmem:[%s155 + $0x38] sm:$0xff]
      %v177 = vld [vmem:[%s161] sm:$0xff]
      %v178 = vld [vmem:[%s161 + $0x8] sm:$0xff]
      %v179 = vld [vmem:[%s161 + $0x10] sm:$0xff]
      %v180 = vld [vmem:[%s161 + $0x18] sm:$0xff]
      %v181 = vld [vmem:[%s161 + $0x20] sm:$0xff]
      %v182 = vld [vmem:[%s161 + $0x28] sm:$0xff]
      %v183 = vld [vmem:[%s161 + $0x30] sm:$0xff]
      %v184 = vld [vmem:[%s161 + $0x38] sm:$0xff]
      %v185 = vmul.f32 %v169, %v169
      %v186 = vmul.f32 %v170, %v170
      %v187 = vmul.f32 %v171, %v171
      %v188 = vmul.f32 %v172, %v172
      %v189 = vmul.f32 %v173, %v173
      %v190 = vmul.f32 %v174, %v174
      %v191 = vmul.f32 %v175, %v175
      %v192 = vmul.f32 %v176, %v176
      %v193 = vmul.f32 %v177, %v177
      %v194 = vmul.f32 %v178, %v178
      %v195 = vmul.f32 %v179, %v179
      %v196 = vmul.f32 %v180, %v180
      %v197 = vmul.f32 %v181, %v181
      %v198 = vmul.f32 %v182, %v182
      %v199 = vmul.f32 %v183, %v183
      %v200 = vmul.f32 %v184, %v184
      %v201 = vmul.f32 %v169, %v177
      %v202 = vmul.f32 %v170, %v178
      %v203 = vmul.f32 %v171, %v179
      %v204 = vmul.f32 %v172, %v180
      %v205 = vmul.f32 %v173, %v181
      %v206 = vmul.f32 %v174, %v182
      %v207 = vmul.f32 %v175, %v183
      %v208 = vmul.f32 %v176, %v184
      %v209 = vlaneseq
      %v210 = vshrl.u32 %v209, 7
      %v211 = vadd.s32 %v210, 8
      %v212 = vadd.s32 %v210, 16
      %v213 = vadd.s32 %v210, 24
      %v214 = vadd.s32 %v210, 32
      %v215 = vadd.s32 %v210, 40
      %v216 = vadd.s32 %v210, 48
      %v217 = vadd.s32 %v210, 56
      %v218 = vadd.s32 %v210, 64
      %v219 = vadd.s32 %v210, 72
      %v220 = vadd.s32 %v210, 80
      %v221 = vadd.s32 %v210, 88
      %v222 = vadd.s32 %v210, 96
      %v223 = vadd.s32 %v210, 104
      %v224 = vadd.s32 %v210, 112
      %v225 = vadd.s32 %v210, 120
      %v226 = vadd.s32 %v210, 128
      %v227 = vadd.s32 %v210, 136
      %v228 = vadd.s32 %v210, 144
      %v229 = vadd.s32 %v210, 152
      %v230 = vadd.s32 %v210, 160
      %v231 = vadd.s32 %v210, 168
      %v232 = vadd.s32 %v210, 176
      %v233 = vadd.s32 %v210, 184
      %v234 = vadd.s32 %v210, 192
      %v235 = vadd.s32 %v210, 200
      %v236 = vadd.s32 %v210, 208
      %v237 = vadd.s32 %v210, 216
      %v238 = vadd.s32 %v210, 224
      %v239 = vadd.s32 %v210, 232
      %v240 = vadd.s32 %v210, 240
      %v241 = vadd.s32 %v210, 248
      %v242 = vadd.s32 %v210, 256
      %v243 = vadd.s32 %v210, 264
      %v244 = vadd.s32 %v210, 272
      %v245 = vadd.s32 %v210, 280
      %v246 = vadd.s32 %v210, 288
      %v247 = vadd.s32 %v210, 296
      %v248 = vadd.s32 %v210, 304
      %v249 = vadd.s32 %v210, 312
      %vm250 = vcmp.lt.s32.totalorder %v210, 0
      %v251 = vsub.s32 0, %v210
      %v252 = vsel %vm250, %v251, %v210
      %v253 = vshrl.u32 %v252, 4
      %v254 = vand.u32 %v252, 15
      %v255 = vsub.s32 0, %v254
      %v256 = vsel %vm250, %v255, %v254
      %vm257 = vcmp.lt.s32.totalorder %v211, 0
      %v258 = vsub.s32 0, %v211
      %v259 = vsel %vm257, %v258, %v211
      %v260 = vshrl.u32 %v259, 4
      %v261 = vand.u32 %v259, 15
      %v262 = vsub.s32 0, %v261
      %v263 = vsel %vm257, %v262, %v261
      %vm264 = vcmp.lt.s32.totalorder %v212, 0
      %v265 = vsub.s32 0, %v212
      %v266 = vsel %vm264, %v265, %v212
      %v267 = vshrl.u32 %v266, 4
      %v268 = vand.u32 %v266, 15
      %v269 = vsub.s32 0, %v268
      %v270 = vsel %vm264, %v269, %v268
      %vm271 = vcmp.lt.s32.totalorder %v213, 0
      %v272 = vsub.s32 0, %v213
      %v273 = vsel %vm271, %v272, %v213
      %v274 = vshrl.u32 %v273, 4
      %v275 = vand.u32 %v273, 15
      %v276 = vsub.s32 0, %v275
      %v277 = vsel %vm271, %v276, %v275
      %vm278 = vcmp.lt.s32.totalorder %v214, 0
      %v279 = vsub.s32 0, %v214
      %v280 = vsel %vm278, %v279, %v214
      %v281 = vshrl.u32 %v280, 4
      %v282 = vand.u32 %v280, 15
      %v283 = vsub.s32 0, %v282
      %v284 = vsel %vm278, %v283, %v282
      %vm285 = vcmp.lt.s32.totalorder %v215, 0
      %v286 = vsub.s32 0, %v215
      %v287 = vsel %vm285, %v286, %v215
      %v288 = vshrl.u32 %v287, 4
      %v289 = vand.u32 %v287, 15
      %v290 = vsub.s32 0, %v289
      %v291 = vsel %vm285, %v290, %v289
      %vm292 = vcmp.lt.s32.totalorder %v216, 0
      %v293 = vsub.s32 0, %v216
      %v294 = vsel %vm292, %v293, %v216
      %v295 = vshrl.u32 %v294, 4
      %v296 = vand.u32 %v294, 15
      %v297 = vsub.s32 0, %v296
      %v298 = vsel %vm292, %v297, %v296
      %vm299 = vcmp.lt.s32.totalorder %v217, 0
      %v300 = vsub.s32 0, %v217
      %v301 = vsel %vm299, %v300, %v217
      %v302 = vshrl.u32 %v301, 4
      %v303 = vand.u32 %v301, 15
      %v304 = vsub.s32 0, %v303
      %v305 = vsel %vm299, %v304, %v303
      %vm306 = vcmp.lt.s32.totalorder %v218, 0
      %v307 = vsub.s32 0, %v218
      %v308 = vsel %vm306, %v307, %v218
      %v309 = vshrl.u32 %v308, 4
      %v310 = vand.u32 %v308, 15
      %v311 = vsub.s32 0, %v310
      %v312 = vsel %vm306, %v311, %v310
      %vm313 = vcmp.lt.s32.totalorder %v219, 0
      %v314 = vsub.s32 0, %v219
      %v315 = vsel %vm313, %v314, %v219
      %v316 = vshrl.u32 %v315, 4
      %v317 = vand.u32 %v315, 15
      %v318 = vsub.s32 0, %v317
      %v319 = vsel %vm313, %v318, %v317
      %vm320 = vcmp.lt.s32.totalorder %v220, 0
      %v321 = vsub.s32 0, %v220
      %v322 = vsel %vm320, %v321, %v220
      %v323 = vshrl.u32 %v322, 4
      %v324 = vand.u32 %v322, 15
      %v325 = vsub.s32 0, %v324
      %v326 = vsel %vm320, %v325, %v324
      %vm327 = vcmp.lt.s32.totalorder %v221, 0
      %v328 = vsub.s32 0, %v221
      %v329 = vsel %vm327, %v328, %v221
      %v330 = vshrl.u32 %v329, 4
      %v331 = vand.u32 %v329, 15
      %v332 = vsub.s32 0, %v331
      %v333 = vsel %vm327, %v332, %v331
      %vm334 = vcmp.lt.s32.totalorder %v222, 0
      %v335 = vsub.s32 0, %v222
      %v336 = vsel %vm334, %v335, %v222
      %v337 = vshrl.u32 %v336, 4
      %v338 = vand.u32 %v336, 15
      %v339 = vsub.s32 0, %v338
      %v340 = vsel %vm334, %v339, %v338
      %vm341 = vcmp.lt.s32.totalorder %v223, 0
      %v342 = vsub.s32 0, %v223
      %v343 = vsel %vm341, %v342, %v223
      %v344 = vshrl.u32 %v343, 4
      %v345 = vand.u32 %v343, 15
      %v346 = vsub.s32 0, %v345
      %v347 = vsel %vm341, %v346, %v345
      %vm348 = vcmp.lt.s32.totalorder %v224, 0
      %v349 = vsub.s32 0, %v224
      %v350 = vsel %vm348, %v349, %v224
      %v351 = vshrl.u32 %v350, 4
      %v352 = vand.u32 %v350, 15
      %v353 = vsub.s32 0, %v352
      %v354 = vsel %vm348, %v353, %v352
      %vm355 = vcmp.lt.s32.totalorder %v225, 0
      %v356 = vsub.s32 0, %v225
      %v357 = vsel %vm355, %v356, %v225
      %v358 = vshrl.u32 %v357, 4
      %v359 = vand.u32 %v357, 15
      %v360 = vsub.s32 0, %v359
      %v361 = vsel %vm355, %v360, %v359
      %vm362 = vcmp.lt.s32.totalorder %v226, 0
      %v363 = vsub.s32 0, %v226
      %v364 = vsel %vm362, %v363, %v226
      %v365 = vshrl.u32 %v364, 4
      %v366 = vand.u32 %v364, 15
      %v367 = vsub.s32 0, %v366
      %v368 = vsel %vm362, %v367, %v366
      %vm369 = vcmp.lt.s32.totalorder %v227, 0
      %v370 = vsub.s32 0, %v227
      %v371 = vsel %vm369, %v370, %v227
      %v372 = vshrl.u32 %v371, 4
      %v373 = vand.u32 %v371, 15
      %v374 = vsub.s32 0, %v373
      %v375 = vsel %vm369, %v374, %v373
      %vm376 = vcmp.lt.s32.totalorder %v228, 0
      %v377 = vsub.s32 0, %v228
      %v378 = vsel %vm376, %v377, %v228
      %v379 = vshrl.u32 %v378, 4
      %v380 = vand.u32 %v378, 15
      %v381 = vsub.s32 0, %v380
      %v382 = vsel %vm376, %v381, %v380
      %vm383 = vcmp.lt.s32.totalorder %v229, 0
      %v384 = vsub.s32 0, %v229
      %v385 = vsel %vm383, %v384, %v229
      %v386 = vshrl.u32 %v385, 4
      %v387 = vand.u32 %v385, 15
      %v388 = vsub.s32 0, %v387
      %v389 = vsel %vm383, %v388, %v387
      %vm390 = vcmp.lt.s32.totalorder %v230, 0
      %v391 = vsub.s32 0, %v230
      %v392 = vsel %vm390, %v391, %v230
      %v393 = vshrl.u32 %v392, 4
      %v394 = vand.u32 %v392, 15
      %v395 = vsub.s32 0, %v394
      %v396 = vsel %vm390, %v395, %v394
      %vm397 = vcmp.lt.s32.totalorder %v231, 0
      %v398 = vsub.s32 0, %v231
      %v399 = vsel %vm397, %v398, %v231
      %v400 = vshrl.u32 %v399, 4
      %v401 = vand.u32 %v399, 15
      %v402 = vsub.s32 0, %v401
      %v403 = vsel %vm397, %v402, %v401
      %vm404 = vcmp.lt.s32.totalorder %v232, 0
      %v405 = vsub.s32 0, %v232
      %v406 = vsel %vm404, %v405, %v232
      %v407 = vshrl.u32 %v406, 4
      %v408 = vand.u32 %v406, 15
      %v409 = vsub.s32 0, %v408
      %v410 = vsel %vm404, %v409, %v408
      %vm411 = vcmp.lt.s32.totalorder %v233, 0
      %v412 = vsub.s32 0, %v233
      %v413 = vsel %vm411, %v412, %v233
      %v414 = vshrl.u32 %v413, 4
      %v415 = vand.u32 %v413, 15
      %v416 = vsub.s32 0, %v415
      %v417 = vsel %vm411, %v416, %v415
      %vm418 = vcmp.lt.s32.totalorder %v234, 0
      %v419 = vsub.s32 0, %v234
      %v420 = vsel %vm418, %v419, %v234
      %v421 = vshrl.u32 %v420, 4
      %v422 = vand.u32 %v420, 15
      %v423 = vsub.s32 0, %v422
      %v424 = vsel %vm418, %v423, %v422
      %vm425 = vcmp.lt.s32.totalorder %v235, 0
      %v426 = vsub.s32 0, %v235
      %v427 = vsel %vm425, %v426, %v235
      %v428 = vshrl.u32 %v427, 4
      %v429 = vand.u32 %v427, 15
      %v430 = vsub.s32 0, %v429
      %v431 = vsel %vm425, %v430, %v429
      %vm432 = vcmp.lt.s32.totalorder %v236, 0
      %v433 = vsub.s32 0, %v236
      %v434 = vsel %vm432, %v433, %v236
      %v435 = vshrl.u32 %v434, 4
      %v436 = vand.u32 %v434, 15
      %v437 = vsub.s32 0, %v436
      %v438 = vsel %vm432, %v437, %v436
      %vm439 = vcmp.lt.s32.totalorder %v237, 0
      %v440 = vsub.s32 0, %v237
      %v441 = vsel %vm439, %v440, %v237
      %v442 = vshrl.u32 %v441, 4
      %v443 = vand.u32 %v441, 15
      %v444 = vsub.s32 0, %v443
      %v445 = vsel %vm439, %v444, %v443
      %vm446 = vcmp.lt.s32.totalorder %v238, 0
      %v447 = vsub.s32 0, %v238
      %v448 = vsel %vm446, %v447, %v238
      %v449 = vshrl.u32 %v448, 4
      %v450 = vand.u32 %v448, 15
      %v451 = vsub.s32 0, %v450
      %v452 = vsel %vm446, %v451, %v450
      %vm453 = vcmp.lt.s32.totalorder %v239, 0
      %v454 = vsub.s32 0, %v239
      %v455 = vsel %vm453, %v454, %v239
      %v456 = vshrl.u32 %v455, 4
      %v457 = vand.u32 %v455, 15
      %v458 = vsub.s32 0, %v457
      %v459 = vsel %vm453, %v458, %v457
      %vm460 = vcmp.lt.s32.totalorder %v240, 0
      %v461 = vsub.s32 0, %v240
      %v462 = vsel %vm460, %v461, %v240
      %v463 = vshrl.u32 %v462, 4
      %v464 = vand.u32 %v462, 15
      %v465 = vsub.s32 0, %v464
      %v466 = vsel %vm460, %v465, %v464
      %vm467 = vcmp.lt.s32.totalorder %v241, 0
      %v468 = vsub.s32 0, %v241
      %v469 = vsel %vm467, %v468, %v241
      %v470 = vshrl.u32 %v469, 4
      %v471 = vand.u32 %v469, 15
      %v472 = vsub.s32 0, %v471
      %v473 = vsel %vm467, %v472, %v471
      %vm474 = vcmp.lt.s32.totalorder %v242, 0
      %v475 = vsub.s32 0, %v242
      %v476 = vsel %vm474, %v475, %v242
      %v477 = vshrl.u32 %v476, 4
      %v478 = vand.u32 %v476, 15
      %v479 = vsub.s32 0, %v478
      %v480 = vsel %vm474, %v479, %v478
      %vm481 = vcmp.lt.s32.totalorder %v243, 0
      %v482 = vsub.s32 0, %v243
      %v483 = vsel %vm481, %v482, %v243
      %v484 = vshrl.u32 %v483, 4
      %v485 = vand.u32 %v483, 15
      %v486 = vsub.s32 0, %v485
      %v487 = vsel %vm481, %v486, %v485
      %vm488 = vcmp.lt.s32.totalorder %v244, 0
      %v489 = vsub.s32 0, %v244
      %v490 = vsel %vm488, %v489, %v244
      %v491 = vshrl.u32 %v490, 4
      %v492 = vand.u32 %v490, 15
      %v493 = vsub.s32 0, %v492
      %v494 = vsel %vm488, %v493, %v492
      %vm495 = vcmp.lt.s32.totalorder %v245, 0
      %v496 = vsub.s32 0, %v245
      %v497 = vsel %vm495, %v496, %v245
      %v498 = vshrl.u32 %v497, 4
      %v499 = vand.u32 %v497, 15
      %v500 = vsub.s32 0, %v499
      %v501 = vsel %vm495, %v500, %v499
      %vm502 = vcmp.lt.s32.totalorder %v246, 0
      %v503 = vsub.s32 0, %v246
      %v504 = vsel %vm502, %v503, %v246
      %v505 = vshrl.u32 %v504, 4
      %v506 = vand.u32 %v504, 15
      %v507 = vsub.s32 0, %v506
      %v508 = vsel %vm502, %v507, %v506
      %vm509 = vcmp.lt.s32.totalorder %v247, 0
      %v510 = vsub.s32 0, %v247
      %v511 = vsel %vm509, %v510, %v247
      %v512 = vshrl.u32 %v511, 4
      %v513 = vand.u32 %v511, 15
      %v514 = vsub.s32 0, %v513
      %v515 = vsel %vm509, %v514, %v513
      %vm516 = vcmp.lt.s32.totalorder %v248, 0
      %v517 = vsub.s32 0, %v248
      %v518 = vsel %vm516, %v517, %v248
      %v519 = vshrl.u32 %v518, 4
      %v520 = vand.u32 %v518, 15
      %v521 = vsub.s32 0, %v520
      %v522 = vsel %vm516, %v521, %v520
      %vm523 = vcmp.lt.s32.totalorder %v249, 0
      %v524 = vsub.s32 0, %v249
      %v525 = vsel %vm523, %v524, %v249
      %v526 = vshrl.u32 %v525, 4
      %v527 = vand.u32 %v525, 15
      %v528 = vsub.s32 0, %v527
      %v529 = vsel %vm523, %v528, %v527
      %vm530 = vcmp.ne.s32.totalorder %v256, 0
      %vm531 = vcmp.ne.s32.totalorder %v263, 0
      %vm532 = vcmp.ne.s32.totalorder %v270, 0
      %vm533 = vcmp.ne.s32.totalorder %v277, 0
      %vm534 = vcmp.ne.s32.totalorder %v284, 0
      %vm535 = vcmp.ne.s32.totalorder %v291, 0
      %vm536 = vcmp.ne.s32.totalorder %v298, 0
      %vm537 = vcmp.ne.s32.totalorder %v305, 0
      %vm538 = vcmp.ne.s32.totalorder %v312, 0
      %vm539 = vcmp.ne.s32.totalorder %v319, 0
      %vm540 = vcmp.ne.s32.totalorder %v326, 0
      %vm541 = vcmp.ne.s32.totalorder %v333, 0
      %vm542 = vcmp.ne.s32.totalorder %v340, 0
      %vm543 = vcmp.ne.s32.totalorder %v347, 0
      %vm544 = vcmp.ne.s32.totalorder %v354, 0
      %vm545 = vcmp.ne.s32.totalorder %v361, 0
      %vm546 = vcmp.ne.s32.totalorder %v368, 0
      %vm547 = vcmp.ne.s32.totalorder %v375, 0
      %vm548 = vcmp.ne.s32.totalorder %v382, 0
      %vm549 = vcmp.ne.s32.totalorder %v389, 0
      %vm550 = vcmp.ne.s32.totalorder %v396, 0
      %vm551 = vcmp.ne.s32.totalorder %v403, 0
      %vm552 = vcmp.ne.s32.totalorder %v410, 0
      %vm553 = vcmp.ne.s32.totalorder %v417, 0
      %vm554 = vcmp.ne.s32.totalorder %v424, 0
      %vm555 = vcmp.ne.s32.totalorder %v431, 0
      %vm556 = vcmp.ne.s32.totalorder %v438, 0
      %vm557 = vcmp.ne.s32.totalorder %v445, 0
      %vm558 = vcmp.ne.s32.totalorder %v452, 0
      %vm559 = vcmp.ne.s32.totalorder %v459, 0
      %vm560 = vcmp.ne.s32.totalorder %v466, 0
      %vm561 = vcmp.ne.s32.totalorder %v473, 0
      %vm562 = vcmp.ne.s32.totalorder %v480, 0
      %vm563 = vcmp.ne.s32.totalorder %v487, 0
      %vm564 = vcmp.ne.s32.totalorder %v494, 0
      %vm565 = vcmp.ne.s32.totalorder %v501, 0
      %vm566 = vcmp.ne.s32.totalorder %v508, 0
      %vm567 = vcmp.ne.s32.totalorder %v515, 0
      %vm568 = vcmp.ne.s32.totalorder %v522, 0
      %vm569 = vcmp.ne.s32.totalorder %v529, 0
      %vm570 = vcmp.lt.s32.totalorder %v256, 0
      %vm571 = vcmp.lt.s32.totalorder %v263, 0
      %vm572 = vcmp.lt.s32.totalorder %v270, 0
      %vm573 = vcmp.lt.s32.totalorder %v277, 0
      %vm574 = vcmp.lt.s32.totalorder %v284, 0
      %vm575 = vcmp.lt.s32.totalorder %v291, 0
      %vm576 = vcmp.lt.s32.totalorder %v298, 0
      %vm577 = vcmp.lt.s32.totalorder %v305, 0
      %vm578 = vcmp.lt.s32.totalorder %v312, 0
      %vm579 = vcmp.lt.s32.totalorder %v319, 0
      %vm580 = vcmp.lt.s32.totalorder %v326, 0
      %vm581 = vcmp.lt.s32.totalorder %v333, 0
      %vm582 = vcmp.lt.s32.totalorder %v340, 0
      %vm583 = vcmp.lt.s32.totalorder %v347, 0
      %vm584 = vcmp.lt.s32.totalorder %v354, 0
      %vm585 = vcmp.lt.s32.totalorder %v361, 0
      %vm586 = vcmp.lt.s32.totalorder %v368, 0
      %vm587 = vcmp.lt.s32.totalorder %v375, 0
      %vm588 = vcmp.lt.s32.totalorder %v382, 0
      %vm589 = vcmp.lt.s32.totalorder %v389, 0
      %vm590 = vcmp.lt.s32.totalorder %v396, 0
      %vm591 = vcmp.lt.s32.totalorder %v403, 0
      %vm592 = vcmp.lt.s32.totalorder %v410, 0
      %vm593 = vcmp.lt.s32.totalorder %v417, 0
      %vm594 = vcmp.lt.s32.totalorder %v424, 0
      %vm595 = vcmp.lt.s32.totalorder %v431, 0
      %vm596 = vcmp.lt.s32.totalorder %v438, 0
      %vm597 = vcmp.lt.s32.totalorder %v445, 0
      %vm598 = vcmp.lt.s32.totalorder %v452, 0
      %vm599 = vcmp.lt.s32.totalorder %v459, 0
      %vm600 = vcmp.lt.s32.totalorder %v466, 0
      %vm601 = vcmp.lt.s32.totalorder %v473, 0
      %vm602 = vcmp.lt.s32.totalorder %v480, 0
      %vm603 = vcmp.lt.s32.totalorder %v487, 0
      %vm604 = vcmp.lt.s32.totalorder %v494, 0
      %vm605 = vcmp.lt.s32.totalorder %v501, 0
      %vm606 = vcmp.lt.s32.totalorder %v508, 0
      %vm607 = vcmp.lt.s32.totalorder %v515, 0
      %vm608 = vcmp.lt.s32.totalorder %v522, 0
      %vm609 = vcmp.lt.s32.totalorder %v529, 0
      %vm610 = vmand %vm570, %vm530
      %vm611 = vmand %vm571, %vm531
      %vm612 = vmand %vm572, %vm532
      %vm613 = vmand %vm573, %vm533
      %vm614 = vmand %vm574, %vm534
      %vm615 = vmand %vm575, %vm535
      %vm616 = vmand %vm576, %vm536
      %vm617 = vmand %vm577, %vm537
      %vm618 = vmand %vm578, %vm538
      %vm619 = vmand %vm579, %vm539
      %vm620 = vmand %vm580, %vm540
      %vm621 = vmand %vm581, %vm541
      %vm622 = vmand %vm582, %vm542
      %vm623 = vmand %vm583, %vm543
      %vm624 = vmand %vm584, %vm544
      %vm625 = vmand %vm585, %vm545
      %vm626 = vmand %vm586, %vm546
      %vm627 = vmand %vm587, %vm547
      %vm628 = vmand %vm588, %vm548
      %vm629 = vmand %vm589, %vm549
      %vm630 = vmand %vm590, %vm550
      %vm631 = vmand %vm591, %vm551
      %vm632 = vmand %vm592, %vm552
      %vm633 = vmand %vm593, %vm553
      %vm634 = vmand %vm594, %vm554
      %vm635 = vmand %vm595, %vm555
      %vm636 = vmand %vm596, %vm556
      %vm637 = vmand %vm597, %vm557
      %vm638 = vmand %vm598, %vm558
      %vm639 = vmand %vm599, %vm559
      %vm640 = vmand %vm600, %vm560
      %vm641 = vmand %vm601, %vm561
      %vm642 = vmand %vm602, %vm562
      %vm643 = vmand %vm603, %vm563
      %vm644 = vmand %vm604, %vm564
      %vm645 = vmand %vm605, %vm565
      %vm646 = vmand %vm606, %vm566
      %vm647 = vmand %vm607, %vm567
      %vm648 = vmand %vm608, %vm568
      %vm649 = vmand %vm609, %vm569
      %v650 = vadd.s32 %v256, 16
      %v651 = vadd.s32 %v263, 16
      %v652 = vadd.s32 %v270, 16
      %v653 = vadd.s32 %v277, 16
      %v654 = vadd.s32 %v284, 16
      %v655 = vadd.s32 %v291, 16
      %v656 = vadd.s32 %v298, 16
      %v657 = vadd.s32 %v305, 16
      %v658 = vadd.s32 %v312, 16
      %v659 = vadd.s32 %v319, 16
      %v660 = vadd.s32 %v326, 16
      %v661 = vadd.s32 %v333, 16
      %v662 = vadd.s32 %v340, 16
      %v663 = vadd.s32 %v347, 16
      %v664 = vadd.s32 %v354, 16
      %v665 = vadd.s32 %v361, 16
      %v666 = vadd.s32 %v368, 16
      %v667 = vadd.s32 %v375, 16
      %v668 = vadd.s32 %v382, 16
      %v669 = vadd.s32 %v389, 16
      %v670 = vadd.s32 %v396, 16
      %v671 = vadd.s32 %v403, 16
      %v672 = vadd.s32 %v410, 16
      %v673 = vadd.s32 %v417, 16
      %v674 = vadd.s32 %v424, 16
      %v675 = vadd.s32 %v431, 16
      %v676 = vadd.s32 %v438, 16
      %v677 = vadd.s32 %v445, 16
      %v678 = vadd.s32 %v452, 16
      %v679 = vadd.s32 %v459, 16
      %v680 = vadd.s32 %v466, 16
      %v681 = vadd.s32 %v473, 16
      %v682 = vadd.s32 %v480, 16
      %v683 = vadd.s32 %v487, 16
      %v684 = vadd.s32 %v494, 16
      %v685 = vadd.s32 %v501, 16
      %v686 = vadd.s32 %v508, 16
      %v687 = vadd.s32 %v515, 16
      %v688 = vadd.s32 %v522, 16
      %v689 = vadd.s32 %v529, 16
      %v690 = vsel %vm610, %v650, %v256
      %v691 = vsel %vm611, %v651, %v263
      %v692 = vsel %vm612, %v652, %v270
      %v693 = vsel %vm613, %v653, %v277
      %v694 = vsel %vm614, %v654, %v284
      %v695 = vsel %vm615, %v655, %v291
      %v696 = vsel %vm616, %v656, %v298
      %v697 = vsel %vm617, %v657, %v305
      %v698 = vsel %vm618, %v658, %v312
      %v699 = vsel %vm619, %v659, %v319
      %v700 = vsel %vm620, %v660, %v326
      %v701 = vsel %vm621, %v661, %v333
      %v702 = vsel %vm622, %v662, %v340
      %v703 = vsel %vm623, %v663, %v347
      %v704 = vsel %vm624, %v664, %v354
      %v705 = vsel %vm625, %v665, %v361
      %v706 = vsel %vm626, %v666, %v368
      %v707 = vsel %vm627, %v667, %v375
      %v708 = vsel %vm628, %v668, %v382
      %v709 = vsel %vm629, %v669, %v389
      %v710 = vsel %vm630, %v670, %v396
      %v711 = vsel %vm631, %v671, %v403
      %v712 = vsel %vm632, %v672, %v410
      %v713 = vsel %vm633, %v673, %v417
      %v714 = vsel %vm634, %v674, %v424
      %v715 = vsel %vm635, %v675, %v431
      %v716 = vsel %vm636, %v676, %v438
      %v717 = vsel %vm637, %v677, %v445
      %v718 = vsel %vm638, %v678, %v452
      %v719 = vsel %vm639, %v679, %v459
      %v720 = vsel %vm640, %v680, %v466
      %v721 = vsel %vm641, %v681, %v473
      %v722 = vsel %vm642, %v682, %v480
      %v723 = vsel %vm643, %v683, %v487
      %v724 = vsel %vm644, %v684, %v494
      %v725 = vsel %vm645, %v685, %v501
      %v726 = vsel %vm646, %v686, %v508
      %v727 = vsel %vm647, %v687, %v515
      %v728 = vsel %vm648, %v688, %v522
      %v729 = vsel %vm649, %v689, %v529
      %vm730 = vcmp.eq.s32.totalorder %v690, 0
      %vm731 = vcmp.eq.s32.totalorder %v691, 0
      %vm732 = vcmp.eq.s32.totalorder %v692, 0
      %vm733 = vcmp.eq.s32.totalorder %v693, 0
      %vm734 = vcmp.eq.s32.totalorder %v694, 0
      %vm735 = vcmp.eq.s32.totalorder %v695, 0
      %vm736 = vcmp.eq.s32.totalorder %v696, 0
      %vm737 = vcmp.eq.s32.totalorder %v697, 0
      %vm738 = vcmp.eq.s32.totalorder %v698, 0
      %vm739 = vcmp.eq.s32.totalorder %v699, 0
      %vm740 = vcmp.eq.s32.totalorder %v700, 0
      %vm741 = vcmp.eq.s32.totalorder %v701, 0
      %vm742 = vcmp.eq.s32.totalorder %v702, 0
      %vm743 = vcmp.eq.s32.totalorder %v703, 0
      %vm744 = vcmp.eq.s32.totalorder %v704, 0
      %vm745 = vcmp.eq.s32.totalorder %v705, 0
      %vm746 = vcmp.eq.s32.totalorder %v706, 0
      %vm747 = vcmp.eq.s32.totalorder %v707, 0
      %vm748 = vcmp.eq.s32.totalorder %v708, 0
      %vm749 = vcmp.eq.s32.totalorder %v709, 0
      %vm750 = vcmp.eq.s32.totalorder %v710, 0
      %vm751 = vcmp.eq.s32.totalorder %v711, 0
      %vm752 = vcmp.eq.s32.totalorder %v712, 0
      %vm753 = vcmp.eq.s32.totalorder %v713, 0
      %vm754 = vcmp.eq.s32.totalorder %v714, 0
      %vm755 = vcmp.eq.s32.totalorder %v715, 0
      %vm756 = vcmp.eq.s32.totalorder %v716, 0
      %vm757 = vcmp.eq.s32.totalorder %v717, 0
      %vm758 = vcmp.eq.s32.totalorder %v718, 0
      %vm759 = vcmp.eq.s32.totalorder %v719, 0
      %vm760 = vcmp.eq.s32.totalorder %v720, 0
      %vm761 = vcmp.eq.s32.totalorder %v721, 0
      %vm762 = vcmp.eq.s32.totalorder %v722, 0
      %vm763 = vcmp.eq.s32.totalorder %v723, 0
      %vm764 = vcmp.eq.s32.totalorder %v724, 0
      %vm765 = vcmp.eq.s32.totalorder %v725, 0
      %vm766 = vcmp.eq.s32.totalorder %v726, 0
      %vm767 = vcmp.eq.s32.totalorder %v727, 0
      %vm768 = vcmp.eq.s32.totalorder %v728, 0
      %vm769 = vcmp.eq.s32.totalorder %v729, 0
      %vm770 = vcmp.eq.s32.totalorder %v690, 15
      %vm771 = vcmp.eq.s32.totalorder %v691, 15
      %vm772 = vcmp.eq.s32.totalorder %v692, 15
      %vm773 = vcmp.eq.s32.totalorder %v693, 15
      %vm774 = vcmp.eq.s32.totalorder %v694, 15
      %vm775 = vcmp.eq.s32.totalorder %v695, 15
      %vm776 = vcmp.eq.s32.totalorder %v696, 15
      %vm777 = vcmp.eq.s32.totalorder %v697, 15
      %vm778 = vcmp.eq.s32.totalorder %v698, 15
      %vm779 = vcmp.eq.s32.totalorder %v699, 15
      %vm780 = vcmp.eq.s32.totalorder %v700, 15
      %vm781 = vcmp.eq.s32.totalorder %v701, 15
      %vm782 = vcmp.eq.s32.totalorder %v702, 15
      %vm783 = vcmp.eq.s32.totalorder %v703, 15
      %vm784 = vcmp.eq.s32.totalorder %v704, 15
      %vm785 = vcmp.eq.s32.totalorder %v705, 15
      %vm786 = vcmp.eq.s32.totalorder %v706, 15
      %vm787 = vcmp.eq.s32.totalorder %v707, 15
      %vm788 = vcmp.eq.s32.totalorder %v708, 15
      %vm789 = vcmp.eq.s32.totalorder %v709, 15
      %vm790 = vcmp.eq.s32.totalorder %v710, 15
      %vm791 = vcmp.eq.s32.totalorder %v711, 15
      %vm792 = vcmp.eq.s32.totalorder %v712, 15
      %vm793 = vcmp.eq.s32.totalorder %v713, 15
      %vm794 = vcmp.eq.s32.totalorder %v714, 15
      %vm795 = vcmp.eq.s32.totalorder %v715, 15
      %vm796 = vcmp.eq.s32.totalorder %v716, 15
      %vm797 = vcmp.eq.s32.totalorder %v717, 15
      %vm798 = vcmp.eq.s32.totalorder %v718, 15
      %vm799 = vcmp.eq.s32.totalorder %v719, 15
      %vm800 = vcmp.eq.s32.totalorder %v720, 15
      %vm801 = vcmp.eq.s32.totalorder %v721, 15
      %vm802 = vcmp.eq.s32.totalorder %v722, 15
      %vm803 = vcmp.eq.s32.totalorder %v723, 15
      %vm804 = vcmp.eq.s32.totalorder %v724, 15
      %vm805 = vcmp.eq.s32.totalorder %v725, 15
      %vm806 = vcmp.eq.s32.totalorder %v726, 15
      %vm807 = vcmp.eq.s32.totalorder %v727, 15
      %vm808 = vcmp.eq.s32.totalorder %v728, 15
      %vm809 = vcmp.eq.s32.totalorder %v729, 15
      %vm850 = vcmask 1040384
      %v851 = vrot.slane %v169, 7
      %v852 = vrot.slane %v170, 7
      %v853 = vsel %vm850, %v851, %v852
      %v854 = vrot.slane %v171, 7
      %v855 = vsel %vm850, %v852, %v854
      %v856 = vrot.slane %v172, 7
      %v857 = vsel %vm850, %v854, %v856
      %v858 = vrot.slane %v173, 7
      %v859 = vsel %vm850, %v856, %v858
      %v860 = vrot.slane %v174, 7
      %v861 = vsel %vm850, %v858, %v860
      %v862 = vrot.slane %v175, 7
      %v863 = vsel %vm850, %v860, %v862
      %v864 = vrot.slane %v176, 7
      %v865 = vsel %vm850, %v862, %v864
      %v866 = vrot.slane %v177, 7
      %v867 = vsel %vm850, %v864, %v866
      %v868 = vrot.slane %v178, 7
      %v869 = vsel %vm850, %v866, %v868
      %v870 = vrot.slane %v179, 7
      %v871 = vsel %vm850, %v868, %v870
      %v872 = vrot.slane %v180, 7
      %v873 = vsel %vm850, %v870, %v872
      %v874 = vrot.slane %v181, 7
      %v875 = vsel %vm850, %v872, %v874
      %v876 = vrot.slane %v182, 7
      %v877 = vsel %vm850, %v874, %v876
      %v878 = vrot.slane %v183, 7
      %v879 = vsel %vm850, %v876, %v878
      %v880 = vrot.slane %v184, 7
      %v881 = vsel %vm850, %v878, %v880
      %v882 = vrot.slane %v185, 7
      %v883 = vsel %vm850, %v880, %v882
      %v884 = vrot.slane %v186, 7
      %v885 = vsel %vm850, %v882, %v884
      %v886 = vrot.slane %v187, 7
      %v887 = vsel %vm850, %v884, %v886
      %v888 = vrot.slane %v188, 7
      %v889 = vsel %vm850, %v886, %v888
      %v890 = vrot.slane %v189, 7
      %v891 = vsel %vm850, %v888, %v890
      %v892 = vrot.slane %v190, 7
      %v893 = vsel %vm850, %v890, %v892
      %v894 = vrot.slane %v191, 7
      %v895 = vsel %vm850, %v892, %v894
      %v896 = vrot.slane %v192, 7
      %v897 = vsel %vm850, %v894, %v896
      %v898 = vrot.slane %v193, 7
      %v899 = vsel %vm850, %v896, %v898
      %v900 = vrot.slane %v194, 7
      %v901 = vsel %vm850, %v898, %v900
      %v902 = vrot.slane %v195, 7
      %v903 = vsel %vm850, %v900, %v902
      %v904 = vrot.slane %v196, 7
      %v905 = vsel %vm850, %v902, %v904
      %v906 = vrot.slane %v197, 7
      %v907 = vsel %vm850, %v904, %v906
      %v908 = vrot.slane %v198, 7
      %v909 = vsel %vm850, %v906, %v908
      %v910 = vrot.slane %v199, 7
      %v911 = vsel %vm850, %v908, %v910
      %v912 = vrot.slane %v200, 7
      %v913 = vsel %vm850, %v910, %v912
      %v914 = vrot.slane %v201, 7
      %v915 = vsel %vm850, %v912, %v914
      %v916 = vrot.slane %v202, 7
      %v917 = vsel %vm850, %v914, %v916
      %v918 = vrot.slane %v203, 7
      %v919 = vsel %vm850, %v916, %v918
      %v920 = vrot.slane %v204, 7
      %v921 = vsel %vm850, %v918, %v920
      %v922 = vrot.slane %v205, 7
      %v923 = vsel %vm850, %v920, %v922
      %v924 = vrot.slane %v206, 7
      %v925 = vsel %vm850, %v922, %v924
      %v926 = vrot.slane %v207, 7
      %v927 = vsel %vm850, %v924, %v926
      %v928 = vrot.slane %v208, 7
      %v929 = vsel %vm850, %v926, %v928
      %v970 = vsel %vm850, %v169, %v851
      %vm971 = vcmask 1046528
      %v972 = vrot.slane %v169, 1
      %v973 = vrot.slane %v170, 1
      %v974 = vsel %vm971, %v972, %v973
      %v975 = vrot.slane %v171, 1
      %v976 = vsel %vm971, %v973, %v975
      %v977 = vrot.slane %v172, 1
      %v978 = vsel %vm971, %v975, %v977
      %v979 = vrot.slane %v173, 1
      %v980 = vsel %vm971, %v977, %v979
      %v981 = vrot.slane %v174, 1
      %v982 = vsel %vm971, %v979, %v981
      %v983 = vrot.slane %v175, 1
      %v984 = vsel %vm971, %v981, %v983
      %v985 = vrot.slane %v176, 1
      %v986 = vsel %vm971, %v983, %v985
      %v987 = vrot.slane %v177, 1
      %v988 = vsel %vm971, %v985, %v987
      %v989 = vrot.slane %v178, 1
      %v990 = vsel %vm971, %v987, %v989
      %v991 = vrot.slane %v179, 1
      %v992 = vsel %vm971, %v989, %v991
      %v993 = vrot.slane %v180, 1
      %v994 = vsel %vm971, %v991, %v993
      %v995 = vrot.slane %v181, 1
      %v996 = vsel %vm971, %v993, %v995
      %v997 = vrot.slane %v182, 1
      %v998 = vsel %vm971, %v995, %v997
      %v999 = vrot.slane %v183, 1
      %v1000 = vsel %vm971, %v997, %v999
      %v1001 = vrot.slane %v184, 1
      %v1002 = vsel %vm971, %v999, %v1001
      %v1003 = vrot.slane %v185, 1
      %v1004 = vsel %vm971, %v1001, %v1003
      %v1005 = vrot.slane %v186, 1
      %v1006 = vsel %vm971, %v1003, %v1005
      %v1007 = vrot.slane %v187, 1
      %v1008 = vsel %vm971, %v1005, %v1007
      %v1009 = vrot.slane %v188, 1
      %v1010 = vsel %vm971, %v1007, %v1009
      %v1011 = vrot.slane %v189, 1
      %v1012 = vsel %vm971, %v1009, %v1011
      %v1013 = vrot.slane %v190, 1
      %v1014 = vsel %vm971, %v1011, %v1013
      %v1015 = vrot.slane %v191, 1
      %v1016 = vsel %vm971, %v1013, %v1015
      %v1017 = vrot.slane %v192, 1
      %v1018 = vsel %vm971, %v1015, %v1017
      %v1019 = vrot.slane %v193, 1
      %v1020 = vsel %vm971, %v1017, %v1019
      %v1021 = vrot.slane %v194, 1
      %v1022 = vsel %vm971, %v1019, %v1021
      %v1023 = vrot.slane %v195, 1
      %v1024 = vsel %vm971, %v1021, %v1023
      %v1025 = vrot.slane %v196, 1
      %v1026 = vsel %vm971, %v1023, %v1025
      %v1027 = vrot.slane %v197, 1
      %v1028 = vsel %vm971, %v1025, %v1027
      %v1029 = vrot.slane %v198, 1
      %v1030 = vsel %vm971, %v1027, %v1029
      %v1031 = vrot.slane %v199, 1
      %v1032 = vsel %vm971, %v1029, %v1031
      %v1033 = vrot.slane %v200, 1
      %v1034 = vsel %vm971, %v1031, %v1033
      %v1035 = vrot.slane %v201, 1
      %v1036 = vsel %vm971, %v1033, %v1035
      %v1037 = vrot.slane %v202, 1
      %v1038 = vsel %vm971, %v1035, %v1037
      %v1039 = vrot.slane %v203, 1
      %v1040 = vsel %vm971, %v1037, %v1039
      %v1041 = vrot.slane %v204, 1
      %v1042 = vsel %vm971, %v1039, %v1041
      %v1043 = vrot.slane %v205, 1
      %v1044 = vsel %vm971, %v1041, %v1043
      %v1045 = vrot.slane %v206, 1
      %v1046 = vsel %vm971, %v1043, %v1045
      %v1047 = vrot.slane %v207, 1
      %v1048 = vsel %vm971, %v1045, %v1047
      %v1049 = vrot.slane %v208, 1
      %v1050 = vsel %vm971, %v1047, %v1049
      %v1091 = vsel %vm971, %v1049, %v208
      %v1092 = vsel %vm730, %v974, %v970
      %v1093 = vsel %vm731, %v976, %v853
      %v1094 = vsel %vm732, %v978, %v855
      %v1095 = vsel %vm733, %v980, %v857
      %v1096 = vsel %vm734, %v982, %v859
      %v1097 = vsel %vm735, %v984, %v861
      %v1098 = vsel %vm736, %v986, %v863
      %v1099 = vsel %vm737, %v988, %v865
      %v1100 = vsel %vm738, %v990, %v867
      %v1101 = vsel %vm739, %v992, %v869
      %v1102 = vsel %vm740, %v994, %v871
      %v1103 = vsel %vm741, %v996, %v873
      %v1104 = vsel %vm742, %v998, %v875
      %v1105 = vsel %vm743, %v1000, %v877
      %v1106 = vsel %vm744, %v1002, %v879
      %v1107 = vsel %vm745, %v1004, %v881
      %v1108 = vsel %vm746, %v1006, %v883
      %v1109 = vsel %vm747, %v1008, %v885
      %v1110 = vsel %vm748, %v1010, %v887
      %v1111 = vsel %vm749, %v1012, %v889
      %v1112 = vsel %vm750, %v1014, %v891
      %v1113 = vsel %vm751, %v1016, %v893
      %v1114 = vsel %vm752, %v1018, %v895
      %v1115 = vsel %vm753, %v1020, %v897
      %v1116 = vsel %vm754, %v1022, %v899
      %v1117 = vsel %vm755, %v1024, %v901
      %v1118 = vsel %vm756, %v1026, %v903
      %v1119 = vsel %vm757, %v1028, %v905
      %v1120 = vsel %vm758, %v1030, %v907
      %v1121 = vsel %vm759, %v1032, %v909
      %v1122 = vsel %vm760, %v1034, %v911
      %v1123 = vsel %vm761, %v1036, %v913
      %v1124 = vsel %vm762, %v1038, %v915
      %v1125 = vsel %vm763, %v1040, %v917
      %v1126 = vsel %vm764, %v1042, %v919
      %v1127 = vsel %vm765, %v1044, %v921
      %v1128 = vsel %vm766, %v1046, %v923
      %v1129 = vsel %vm767, %v1048, %v925
      %v1130 = vsel %vm768, %v1050, %v927
      %v1131 = vsel %vm769, %v1091, %v929
      %v1132 = vsel %vm770, %v1092, %v974
      %v1133 = vsel %vm771, %v1093, %v976
      %v1134 = vsel %vm772, %v1094, %v978
      %v1135 = vsel %vm773, %v1095, %v980
      %v1136 = vsel %vm774, %v1096, %v982
      %v1137 = vsel %vm775, %v1097, %v984
      %v1138 = vsel %vm776, %v1098, %v986
      %v1139 = vsel %vm777, %v1099, %v988
      %v1140 = vsel %vm778, %v1100, %v990
      %v1141 = vsel %vm779, %v1101, %v992
      %v1142 = vsel %vm780, %v1102, %v994
      %v1143 = vsel %vm781, %v1103, %v996
      %v1144 = vsel %vm782, %v1104, %v998
      %v1145 = vsel %vm783, %v1105, %v1000
      %v1146 = vsel %vm784, %v1106, %v1002
      %v1147 = vsel %vm785, %v1107, %v1004
      %v1148 = vsel %vm786, %v1108, %v1006
      %v1149 = vsel %vm787, %v1109, %v1008
      %v1150 = vsel %vm788, %v1110, %v1010
      %v1151 = vsel %vm789, %v1111, %v1012
      %v1152 = vsel %vm790, %v1112, %v1014
      %v1153 = vsel %vm791, %v1113, %v1016
      %v1154 = vsel %vm792, %v1114, %v1018
      %v1155 = vsel %vm793, %v1115, %v1020
      %v1156 = vsel %vm794, %v1116, %v1022
      %v1157 = vsel %vm795, %v1117, %v1024
      %v1158 = vsel %vm796, %v1118, %v1026
      %v1159 = vsel %vm797, %v1119, %v1028
      %v1160 = vsel %vm798, %v1120, %v1030
      %v1161 = vsel %vm799, %v1121, %v1032
      %v1162 = vsel %vm800, %v1122, %v1034
      %v1163 = vsel %vm801, %v1123, %v1036
      %v1164 = vsel %vm802, %v1124, %v1038
      %v1165 = vsel %vm803, %v1125, %v1040
      %v1166 = vsel %vm804, %v1126, %v1042
      %v1167 = vsel %vm805, %v1127, %v1044
      %v1168 = vsel %vm806, %v1128, %v1046
      %v1169 = vsel %vm807, %v1129, %v1048
      %v1170 = vsel %vm808, %v1130, %v1050
      %v1171 = vsel %vm809, %v1131, %v1091
      %v1172 = vadd.f32 %v1092, %v169
      %v1173 = vadd.f32 %v1093, %v170
      %v1174 = vadd.f32 %v1094, %v171
      %v1175 = vadd.f32 %v1095, %v172
      %v1176 = vadd.f32 %v1096, %v173
      %v1177 = vadd.f32 %v1097, %v174
      %v1178 = vadd.f32 %v1098, %v175
      %v1179 = vadd.f32 %v1099, %v176
      %v1180 = vadd.f32 %v1100, %v177
      %v1181 = vadd.f32 %v1101, %v178
      %v1182 = vadd.f32 %v1102, %v179
      %v1183 = vadd.f32 %v1103, %v180
      %v1184 = vadd.f32 %v1104, %v181
      %v1185 = vadd.f32 %v1105, %v182
      %v1186 = vadd.f32 %v1106, %v183
      %v1187 = vadd.f32 %v1107, %v184
      %v1188 = vadd.f32 %v1108, %v185
      %v1189 = vadd.f32 %v1109, %v186
      %v1190 = vadd.f32 %v1110, %v187
      %v1191 = vadd.f32 %v1111, %v188
      %v1192 = vadd.f32 %v1112, %v189
      %v1193 = vadd.f32 %v1113, %v190
      %v1194 = vadd.f32 %v1114, %v191
      %v1195 = vadd.f32 %v1115, %v192
      %v1196 = vadd.f32 %v1116, %v193
      %v1197 = vadd.f32 %v1117, %v194
      %v1198 = vadd.f32 %v1118, %v195
      %v1199 = vadd.f32 %v1119, %v196
      %v1200 = vadd.f32 %v1120, %v197
      %v1201 = vadd.f32 %v1121, %v198
      %v1202 = vadd.f32 %v1122, %v199
      %v1203 = vadd.f32 %v1123, %v200
      %v1204 = vadd.f32 %v1124, %v201
      %v1205 = vadd.f32 %v1125, %v202
      %v1206 = vadd.f32 %v1126, %v203
      %v1207 = vadd.f32 %v1127, %v204
      %v1208 = vadd.f32 %v1128, %v205
      %v1209 = vadd.f32 %v1129, %v206
      %v1210 = vadd.f32 %v1130, %v207
      %v1211 = vadd.f32 %v1131, %v208
      %v1212 = vadd.f32 %v1172, %v1132
      %v1213 = vadd.f32 %v1173, %v1133
      %v1214 = vadd.f32 %v1174, %v1134
      %v1215 = vadd.f32 %v1175, %v1135
      %v1216 = vadd.f32 %v1176, %v1136
      %v1217 = vadd.f32 %v1177, %v1137
      %v1218 = vadd.f32 %v1178, %v1138
      %v1219 = vadd.f32 %v1179, %v1139
      %v1220 = vadd.f32 %v1180, %v1140
      %v1221 = vadd.f32 %v1181, %v1141
      %v1222 = vadd.f32 %v1182, %v1142
      %v1223 = vadd.f32 %v1183, %v1143
      %v1224 = vadd.f32 %v1184, %v1144
      %v1225 = vadd.f32 %v1185, %v1145
      %v1226 = vadd.f32 %v1186, %v1146
      %v1227 = vadd.f32 %v1187, %v1147
      %v1228 = vadd.f32 %v1188, %v1148
      %v1229 = vadd.f32 %v1189, %v1149
      %v1230 = vadd.f32 %v1190, %v1150
      %v1231 = vadd.f32 %v1191, %v1151
      %v1232 = vadd.f32 %v1192, %v1152
      %v1233 = vadd.f32 %v1193, %v1153
      %v1234 = vadd.f32 %v1194, %v1154
      %v1235 = vadd.f32 %v1195, %v1155
      %v1236 = vadd.f32 %v1196, %v1156
      %v1237 = vadd.f32 %v1197, %v1157
      %v1238 = vadd.f32 %v1198, %v1158
      %v1239 = vadd.f32 %v1199, %v1159
      %v1240 = vadd.f32 %v1200, %v1160
      %v1241 = vadd.f32 %v1201, %v1161
      %v1242 = vadd.f32 %v1202, %v1162
      %v1243 = vadd.f32 %v1203, %v1163
      %v1244 = vadd.f32 %v1204, %v1164
      %v1245 = vadd.f32 %v1205, %v1165
      %v1246 = vadd.f32 %v1206, %v1166
      %v1247 = vadd.f32 %v1207, %v1167
      %v1248 = vadd.f32 %v1208, %v1168
      %v1249 = vadd.f32 %v1209, %v1169
      %v1250 = vadd.f32 %v1210, %v1170
      %v1251 = vadd.f32 %v1211, %v1171
      %v1252 = vlaneseq
      %v1253 = vand.u32 %v1252, 127
      %v1254 = vsub.s32 %v210, %v1253
      %v1255 = vsub.s32 %v211, %v1253
      %vm1256 = vcmp.lt.s32.totalorder %v1254, 0
      %v1257 = vsub.s32 0, %v1254
      %v1258 = vsel %vm1256, %v1257, %v1254
      %vm1259 = vcmp.lt.s32.totalorder %v1255, 0
      %v1260 = vsub.s32 0, %v1255
      %v1261 = vsel %vm1259, %v1260, %v1255
      %vm1262 = vcmp.le.s32.totalorder %v1258, 1
      %vm1263 = vcmp.le.s32.totalorder %v1261, 1
      %v1264 = vsel %vm1262, 1, 0
      %v1265 = vsel %vm1263, 1, 0
      %v1266 = vcvt.s32.f32 %v1264
      %v1267 = vcvt.s32.f32 %v1265
      %vm1268 = vcmp.eq.s32.totalorder %v210, 1
      %vm1269 = vcmp.eq.s32.totalorder %v211, 1
      %vm1270 = vcmp.eq.s32.totalorder %v1253, 0
      %vm1271 = vmand %vm1268, %vm1270
      %vm1272 = vmand %vm1269, %vm1270
      %vm1273 = vcmp.eq.s32.totalorder %v210, 14
      %vm1274 = vcmp.eq.s32.totalorder %v211, 14
      %vm1275 = vcmp.eq.s32.totalorder %v1253, 15
      %vm1276 = vmand %vm1273, %vm1275
      %vm1277 = vmand %vm1274, %vm1275
      %vm1278 = vmor %vm1271, %vm1276
      %vm1279 = vmor %vm1272, %vm1277
      %v1280 = vsel %vm1278, 1, 0
      %v1281 = vsel %vm1279, 1, 0
      %v1282 = vcvt.s32.f32 %v1280
      %v1283 = vcvt.s32.f32 %v1281
      %v1284 = vadd.f32 %v1266, %v1282
      %v1285 = vadd.f32 %v1267, %v1283
      %vm1286 = vcmask 130048
      %v1288 = vsel %vm1286, %v1212, 0
      %v1291 = vsel %vm1286, %v1213, 0
      %v1294 = vsel %vm1286, %v1214, 0
      %v1297 = vsel %vm1286, %v1215, 0
      %v1300 = vsel %vm1286, %v1216, 0
      %v1303 = vsel %vm1286, %v1217, 0
      %v1306 = vsel %vm1286, %v1218, 0
      %v1309 = vsel %vm1286, %v1219, 0
      %v1312 = vsel %vm1286, %v1220, 0
      %v1315 = vsel %vm1286, %v1221, 0
      %v1318 = vsel %vm1286, %v1222, 0
      %v1321 = vsel %vm1286, %v1223, 0
      %v1324 = vsel %vm1286, %v1224, 0
      %v1327 = vsel %vm1286, %v1225, 0
      %v1330 = vsel %vm1286, %v1226, 0
      %v1333 = vsel %vm1286, %v1227, 0
      %v1336 = vsel %vm1286, %v1228, 0
      %v1339 = vsel %vm1286, %v1229, 0
      %v1342 = vsel %vm1286, %v1230, 0
      %v1345 = vsel %vm1286, %v1231, 0
      %v1348 = vsel %vm1286, %v1232, 0
      %v1351 = vsel %vm1286, %v1233, 0
      %v1354 = vsel %vm1286, %v1234, 0
      %v1357 = vsel %vm1286, %v1235, 0
      %v1360 = vsel %vm1286, %v1236, 0
      %v1363 = vsel %vm1286, %v1237, 0
      %v1366 = vsel %vm1286, %v1238, 0
      %v1369 = vsel %vm1286, %v1239, 0
      %v1372 = vsel %vm1286, %v1240, 0
      %v1375 = vsel %vm1286, %v1241, 0
      %v1378 = vsel %vm1286, %v1242, 0
      %v1381 = vsel %vm1286, %v1243, 0
      %v1384 = vsel %vm1286, %v1244, 0
      %v1387 = vsel %vm1286, %v1245, 0
      %v1390 = vsel %vm1286, %v1246, 0
      %v1393 = vsel %vm1286, %v1247, 0
      %v1396 = vsel %vm1286, %v1248, 0
      %v1399 = vsel %vm1286, %v1249, 0
      %v1402 = vsel %vm1286, %v1250, 0
      %v1405 = vsel %vm1286, %v1251, 0
      %1407 = vmatprep.subr.mxu0 0.0
      %1408 = vmatpush1.msra.mxu0 %v1284
      %1409 = vmatprep.subr.mxu0 0.0
      %1410 = vmatpush1.msra.mxu0 %v1285
      %1411 = vmatprep.subr.mxu0 0.0
      %1412 = vmatpush1.msra.mxu0 0.0
      %1413 = vmatprep.subr.mxu0 0.0
      %1414 = vmatpush1.msra.mxu0 0.0
      %1415 = vmatprep.subr.mxu0 0.0
      %1416 = vmatpush1.msra.mxu0 0.0
      %1417 = vmatprep.subr.mxu0 0.0
      %1418 = vmatpush1.msra.mxu0 0.0
      %1419 = vmatprep.subr.mxu0 0.0
      %1420 = vmatpush1.msra.mxu0 0.0
      %1421 = vmatprep.subr.mxu0 0.0
      %1422 = vmatpush1.msra.mxu0 0.0
      %1423 = vmatprep.subr.mxu0 0.0
      %1424 = vmatpush1.msra.mxu0 0.0
      %1425 = vmatprep.subr.mxu0 0.0
      %1426 = vmatpush1.msra.mxu0 0.0
      %1427 = vmatprep.subr.mxu0 0.0
      %1428 = vmatpush1.msra.mxu0 0.0
      %1429 = vmatprep.subr.mxu0 0.0
      %1430 = vmatpush1.msra.mxu0 0.0
      %1431 = vmatprep.subr.mxu0 0.0
      %1432 = vmatpush1.msra.mxu0 0.0
      %1433 = vmatprep.subr.mxu0 0.0
      %1434 = vmatpush1.msra.mxu0 0.0
      %1435 = vmatprep.subr.mxu0 0.0
      %1436 = vmatpush1.msra.mxu0 0.0
      %1437 = vmatprep.subr.mxu0 0.0
      %1438 = vmatpush1.msra.mxu0 0.0
      %1439 = vmatprep.subr.mxu0 0.0
      %1440 = vmatpush1.msra.mxu0 0.0
      %1441 = vmatprep.subr.mxu0 0.0
      %1442 = vmatpush1.msra.mxu0 0.0
      %1443 = vmatprep.subr.mxu0 0.0
      %1444 = vmatpush1.msra.mxu0 0.0
      %1445 = vmatprep.subr.mxu0 0.0
      %1446 = vmatpush1.msra.mxu0 0.0
      %1447 = vmatprep.subr.mxu0 0.0
      %1448 = vmatpush1.msra.mxu0 0.0
      %1449 = vmatprep.subr.mxu0 0.0
      %1450 = vmatpush1.msra.mxu0 0.0
      %1451 = vmatprep.subr.mxu0 0.0
      %1452 = vmatpush1.msra.mxu0 0.0
      %1453 = vmatprep.subr.mxu0 0.0
      %1454 = vmatpush1.msra.mxu0 0.0
      %1455 = vmatprep.subr.mxu0 0.0
      %1456 = vmatpush1.msra.mxu0 0.0
      %1457 = vmatprep.subr.mxu0 0.0
      %1458 = vmatpush1.msra.mxu0 0.0
      %1459 = vmatprep.subr.mxu0 0.0
      %1460 = vmatpush1.msra.mxu0 0.0
      %1461 = vmatprep.subr.mxu0 0.0
      %1462 = vmatpush1.msra.mxu0 0.0
      %1463 = vmatprep.subr.mxu0 0.0
      %1464 = vmatpush1.msra.mxu0 0.0
      %1465 = vmatprep.subr.mxu0 0.0
      %1466 = vmatpush1.msra.mxu0 0.0
      %1467 = vmatprep.subr.mxu0 0.0
      %1468 = vmatpush1.msra.mxu0 0.0
      %1469 = vmatprep.subr.mxu0 0.0
      %1470 = vmatpush1.msra.mxu0 0.0
      %1471 = vmatprep.mubr.f32.mxu0 0.0
      %1472 = vmatmul.mubr.f32.gmra.mrb[0].mxu0 %v1288
      %v1473 = vpop.f32.mrb[0].mxu0
      %v1474 = vadd.f32 0.0, %v1473
      %v1475 = vpop.f32.mrb[0].mxu0
      %1476 = vmatprep.mubr.f32.mxu0 0.0
      %1477 = vmatmul.mubr.f32.gmra.mrb[0].mxu0 %v1291
      %v1478 = vpop.f32.mrb[0].mxu0
      %v1479 = vadd.f32 0.0, %v1478
      %v1480 = vpop.f32.mrb[0].mxu0
      %1481 = vmatprep.mubr.f32.mxu0 0.0
      %1482 = vmatmul.mubr.f32.gmra.mrb[0].mxu0 %v1294
      %v1483 = vpop.f32.mrb[0].mxu0
      %v1484 = vadd.f32 0.0, %v1483
      %v1485 = vpop.f32.mrb[0].mxu0
      %1486 = vmatprep.mubr.f32.mxu0 0.0
      %1487 = vmatmul.mubr.f32.gmra.mrb[0].mxu0 %v1297
      %v1488 = vpop.f32.mrb[0].mxu0
      %v1489 = vadd.f32 0.0, %v1488
      %v1490 = vpop.f32.mrb[0].mxu0
      %1491 = vmatprep.mubr.f32.mxu0 0.0
      %1492 = vmatmul.mubr.f32.gmra.mrb[0].mxu0 %v1300
      %v1493 = vpop.f32.mrb[0].mxu0
      %v1494 = vadd.f32 0.0, %v1493
      %v1495 = vpop.f32.mrb[0].mxu0
      %1496 = vmatprep.mubr.f32.mxu0 0.0
      %1497 = vmatmul.mubr.f32.gmra.mrb[0].mxu0 %v1303
      %v1498 = vpop.f32.mrb[0].mxu0
      %v1499 = vadd.f32 0.0, %v1498
      %v1500 = vpop.f32.mrb[0].mxu0
      %1501 = vmatprep.mubr.f32.mxu0 0.0
      %1502 = vmatmul.mubr.f32.gmra.mrb[0].mxu0 %v1306
      %v1503 = vpop.f32.mrb[0].mxu0
      %v1504 = vadd.f32 0.0, %v1503
      %v1505 = vpop.f32.mrb[0].mxu0
      %1506 = vmatprep.mubr.f32.mxu0 0.0
      %1507 = vmatmul.mubr.f32.gmra.mrb[0].mxu0 %v1309
      %v1508 = vpop.f32.mrb[0].mxu0
      %v1509 = vadd.f32 0.0, %v1508
      %v1510 = vpop.f32.mrb[0].mxu0
      %1511 = vmatprep.mubr.f32.mxu0 0.0
      %1512 = vmatmul.mubr.f32.gmra.mrb[0].mxu0 %v1312
      %v1513 = vpop.f32.mrb[0].mxu0
      %v1514 = vadd.f32 0.0, %v1513
      %v1515 = vpop.f32.mrb[0].mxu0
      %1516 = vmatprep.mubr.f32.mxu0 0.0
      %1517 = vmatmul.mubr.f32.gmra.mrb[0].mxu0 %v1315
      %v1518 = vpop.f32.mrb[0].mxu0
      %v1519 = vadd.f32 0.0, %v1518
      %v1520 = vpop.f32.mrb[0].mxu0
      %1521 = vmatprep.mubr.f32.mxu0 0.0
      %1522 = vmatmul.mubr.f32.gmra.mrb[0].mxu0 %v1318
      %v1523 = vpop.f32.mrb[0].mxu0
      %v1524 = vadd.f32 0.0, %v1523
      %v1525 = vpop.f32.mrb[0].mxu0
      %1526 = vmatprep.mubr.f32.mxu0 0.0
      %1527 = vmatmul.mubr.f32.gmra.mrb[0].mxu0 %v1321
      %v1528 = vpop.f32.mrb[0].mxu0
      %v1529 = vadd.f32 0.0, %v1528
      %v1530 = vpop.f32.mrb[0].mxu0
      %1531 = vmatprep.mubr.f32.mxu0 0.0
      %1532 = vmatmul.mubr.f32.gmra.mrb[0].mxu0 %v1324
      %v1533 = vpop.f32.mrb[0].mxu0
      %v1534 = vadd.f32 0.0, %v1533
      %v1535 = vpop.f32.mrb[0].mxu0
      %1536 = vmatprep.mubr.f32.mxu0 0.0
      %1537 = vmatmul.mubr.f32.gmra.mrb[0].mxu0 %v1327
      %v1538 = vpop.f32.mrb[0].mxu0
      %v1539 = vadd.f32 0.0, %v1538
      %v1540 = vpop.f32.mrb[0].mxu0
      %1541 = vmatprep.mubr.f32.mxu0 0.0
      %1542 = vmatmul.mubr.f32.gmra.mrb[0].mxu0 %v1330
      %v1543 = vpop.f32.mrb[0].mxu0
      %v1544 = vadd.f32 0.0, %v1543
      %v1545 = vpop.f32.mrb[0].mxu0
      %1546 = vmatprep.mubr.f32.mxu0 0.0
      %1547 = vmatmul.mubr.f32.gmra.mrb[0].mxu0 %v1333
      %v1548 = vpop.f32.mrb[0].mxu0
      %v1549 = vadd.f32 0.0, %v1548
      %v1550 = vpop.f32.mrb[0].mxu0
      %1551 = vmatprep.mubr.f32.mxu0 0.0
      %1552 = vmatmul.mubr.f32.gmra.mrb[0].mxu0 %v1336
      %v1553 = vpop.f32.mrb[0].mxu0
      %v1554 = vadd.f32 0.0, %v1553
      %v1555 = vpop.f32.mrb[0].mxu0
      %1556 = vmatprep.mubr.f32.mxu0 0.0
      %1557 = vmatmul.mubr.f32.gmra.mrb[0].mxu0 %v1339
      %v1558 = vpop.f32.mrb[0].mxu0
      %v1559 = vadd.f32 0.0, %v1558
      %v1560 = vpop.f32.mrb[0].mxu0
      %1561 = vmatprep.mubr.f32.mxu0 0.0
      %1562 = vmatmul.mubr.f32.gmra.mrb[0].mxu0 %v1342
      %v1563 = vpop.f32.mrb[0].mxu0
      %v1564 = vadd.f32 0.0, %v1563
      %v1565 = vpop.f32.mrb[0].mxu0
      %1566 = vmatprep.mubr.f32.mxu0 0.0
      %1567 = vmatmul.mubr.f32.gmra.mrb[0].mxu0 %v1345
      %v1568 = vpop.f32.mrb[0].mxu0
      %v1569 = vadd.f32 0.0, %v1568
      %v1570 = vpop.f32.mrb[0].mxu0
      %1571 = vmatprep.mubr.f32.mxu0 0.0
      %1572 = vmatmul.mubr.f32.gmra.mrb[0].mxu0 %v1348
      %v1573 = vpop.f32.mrb[0].mxu0
      %v1574 = vadd.f32 0.0, %v1573
      %v1575 = vpop.f32.mrb[0].mxu0
      %1576 = vmatprep.mubr.f32.mxu0 0.0
      %1577 = vmatmul.mubr.f32.gmra.mrb[0].mxu0 %v1351
      %v1578 = vpop.f32.mrb[0].mxu0
      %v1579 = vadd.f32 0.0, %v1578
      %v1580 = vpop.f32.mrb[0].mxu0
      %1581 = vmatprep.mubr.f32.mxu0 0.0
      %1582 = vmatmul.mubr.f32.gmra.mrb[0].mxu0 %v1354
      %v1583 = vpop.f32.mrb[0].mxu0
      %v1584 = vadd.f32 0.0, %v1583
      %v1585 = vpop.f32.mrb[0].mxu0
      %1586 = vmatprep.mubr.f32.mxu0 0.0
      %1587 = vmatmul.mubr.f32.gmra.mrb[0].mxu0 %v1357
      %v1588 = vpop.f32.mrb[0].mxu0
      %v1589 = vadd.f32 0.0, %v1588
      %v1590 = vpop.f32.mrb[0].mxu0
      %1591 = vmatprep.mubr.f32.mxu0 0.0
      %1592 = vmatmul.mubr.f32.gmra.mrb[0].mxu0 %v1360
      %v1593 = vpop.f32.mrb[0].mxu0
      %v1594 = vadd.f32 0.0, %v1593
      %v1595 = vpop.f32.mrb[0].mxu0
      %1596 = vmatprep.mubr.f32.mxu0 0.0
      %1597 = vmatmul.mubr.f32.gmra.mrb[0].mxu0 %v1363
      %v1598 = vpop.f32.mrb[0].mxu0
      %v1599 = vadd.f32 0.0, %v1598
      %v1600 = vpop.f32.mrb[0].mxu0
      %1601 = vmatprep.mubr.f32.mxu0 0.0
      %1602 = vmatmul.mubr.f32.gmra.mrb[0].mxu0 %v1366
      %v1603 = vpop.f32.mrb[0].mxu0
      %v1604 = vadd.f32 0.0, %v1603
      %v1605 = vpop.f32.mrb[0].mxu0
      %1606 = vmatprep.mubr.f32.mxu0 0.0
      %1607 = vmatmul.mubr.f32.gmra.mrb[0].mxu0 %v1369
      %v1608 = vpop.f32.mrb[0].mxu0
      %v1609 = vadd.f32 0.0, %v1608
      %v1610 = vpop.f32.mrb[0].mxu0
      %1611 = vmatprep.mubr.f32.mxu0 0.0
      %1612 = vmatmul.mubr.f32.gmra.mrb[0].mxu0 %v1372
      %v1613 = vpop.f32.mrb[0].mxu0
      %v1614 = vadd.f32 0.0, %v1613
      %v1615 = vpop.f32.mrb[0].mxu0
      %1616 = vmatprep.mubr.f32.mxu0 0.0
      %1617 = vmatmul.mubr.f32.gmra.mrb[0].mxu0 %v1375
      %v1618 = vpop.f32.mrb[0].mxu0
      %v1619 = vadd.f32 0.0, %v1618
      %v1620 = vpop.f32.mrb[0].mxu0
      %1621 = vmatprep.mubr.f32.mxu0 0.0
      %1622 = vmatmul.mubr.f32.gmra.mrb[0].mxu0 %v1378
      %v1623 = vpop.f32.mrb[0].mxu0
      %v1624 = vadd.f32 0.0, %v1623
      %v1625 = vpop.f32.mrb[0].mxu0
      %1626 = vmatprep.mubr.f32.mxu0 0.0
      %1627 = vmatmul.mubr.f32.gmra.mrb[0].mxu0 %v1381
      %v1628 = vpop.f32.mrb[0].mxu0
      %v1629 = vadd.f32 0.0, %v1628
      %v1630 = vpop.f32.mrb[0].mxu0
      %1631 = vmatprep.mubr.f32.mxu0 0.0
      %1632 = vmatmul.mubr.f32.gmra.mrb[0].mxu0 %v1384
      %v1633 = vpop.f32.mrb[0].mxu0
      %v1634 = vadd.f32 0.0, %v1633
      %v1635 = vpop.f32.mrb[0].mxu0
      %1636 = vmatprep.mubr.f32.mxu0 0.0
      %1637 = vmatmul.mubr.f32.gmra.mrb[0].mxu0 %v1387
      %v1638 = vpop.f32.mrb[0].mxu0
      %v1639 = vadd.f32 0.0, %v1638
      %v1640 = vpop.f32.mrb[0].mxu0
      %1641 = vmatprep.mubr.f32.mxu0 0.0
      %1642 = vmatmul.mubr.f32.gmra.mrb[0].mxu0 %v1390
      %v1643 = vpop.f32.mrb[0].mxu0
      %v1644 = vadd.f32 0.0, %v1643
      %v1645 = vpop.f32.mrb[0].mxu0
      %1646 = vmatprep.mubr.f32.mxu0 0.0
      %1647 = vmatmul.mubr.f32.gmra.mrb[0].mxu0 %v1393
      %v1648 = vpop.f32.mrb[0].mxu0
      %v1649 = vadd.f32 0.0, %v1648
      %v1650 = vpop.f32.mrb[0].mxu0
      %1651 = vmatprep.mubr.f32.mxu0 0.0
      %1652 = vmatmul.mubr.f32.gmra.mrb[0].mxu0 %v1396
      %v1653 = vpop.f32.mrb[0].mxu0
      %v1654 = vadd.f32 0.0, %v1653
      %v1655 = vpop.f32.mrb[0].mxu0
      %1656 = vmatprep.mubr.f32.mxu0 0.0
      %1657 = vmatmul.mubr.f32.gmra.mrb[0].mxu0 %v1399
      %v1658 = vpop.f32.mrb[0].mxu0
      %v1659 = vadd.f32 0.0, %v1658
      %v1660 = vpop.f32.mrb[0].mxu0
      %1661 = vmatprep.mubr.f32.mxu0 0.0
      %1662 = vmatmul.mubr.f32.gmra.mrb[0].mxu0 %v1402
      %v1663 = vpop.f32.mrb[0].mxu0
      %v1664 = vadd.f32 0.0, %v1663
      %v1665 = vpop.f32.mrb[0].mxu0
      %1666 = vmatprep.mubr.f32.mxu0 0.0
      %1667 = vmatmul.mubr.f32.gmra.mrb[0].mxu0 %v1405
      %v1668 = vpop.f32.mrb[0].mxu0
      %v1669 = vadd.f32 0.0, %v1668
      %v1670 = vpop.f32.mrb[0].mxu0
      %1671 = vdwg.mxu0
      %v1672 = vmul.f32 %v1474, 0.11111111
      %v1673 = vmul.f32 %v1479, 0.11111111
      %v1674 = vmul.f32 %v1484, 0.11111111
      %v1675 = vmul.f32 %v1489, 0.11111111
      %v1676 = vmul.f32 %v1494, 0.11111111
      %v1677 = vmul.f32 %v1499, 0.11111111
      %v1678 = vmul.f32 %v1504, 0.11111111
      %v1679 = vmul.f32 %v1509, 0.11111111
      %v1680 = vmul.f32 %v1514, 0.11111111
      %v1681 = vmul.f32 %v1519, 0.11111111
      %v1682 = vmul.f32 %v1524, 0.11111111
      %v1683 = vmul.f32 %v1529, 0.11111111
      %v1684 = vmul.f32 %v1534, 0.11111111
      %v1685 = vmul.f32 %v1539, 0.11111111
      %v1686 = vmul.f32 %v1544, 0.11111111
      %v1687 = vmul.f32 %v1549, 0.11111111
      %v1688 = vmul.f32 %v1554, 0.11111111
      %v1689 = vmul.f32 %v1559, 0.11111111
      %v1690 = vmul.f32 %v1564, 0.11111111
      %v1691 = vmul.f32 %v1569, 0.11111111
      %v1692 = vmul.f32 %v1574, 0.11111111
      %v1693 = vmul.f32 %v1579, 0.11111111
      %v1694 = vmul.f32 %v1584, 0.11111111
      %v1695 = vmul.f32 %v1589, 0.11111111
      %v1696 = vmul.f32 %v1594, 0.11111111
      %v1697 = vmul.f32 %v1599, 0.11111111
      %v1698 = vmul.f32 %v1604, 0.11111111
      %v1699 = vmul.f32 %v1609, 0.11111111
      %v1700 = vmul.f32 %v1614, 0.11111111
      %v1701 = vmul.f32 %v1619, 0.11111111
      %v1702 = vmul.f32 %v1624, 0.11111111
      %v1703 = vmul.f32 %v1629, 0.11111111
      %v1704 = vmul.f32 %v1634, 0.11111111
      %v1705 = vmul.f32 %v1639, 0.11111111
      %v1706 = vmul.f32 %v1644, 0.11111111
      %v1707 = vmul.f32 %v1649, 0.11111111
      %v1708 = vmul.f32 %v1654, 0.11111111
      %v1709 = vmul.f32 %v1659, 0.11111111
      %v1710 = vmul.f32 %v1664, 0.11111111
      %v1711 = vmul.f32 %v1669, 0.11111111
      %v1712 = vmul.f32 %v1672, %v1672
      %v1713 = vmul.f32 %v1673, %v1673
      %v1714 = vmul.f32 %v1674, %v1674
      %v1715 = vmul.f32 %v1675, %v1675
      %v1716 = vmul.f32 %v1676, %v1676
      %v1717 = vmul.f32 %v1677, %v1677
      %v1718 = vmul.f32 %v1678, %v1678
      %v1719 = vmul.f32 %v1679, %v1679
      %v1720 = vmul.f32 %v1680, %v1680
      %v1721 = vmul.f32 %v1681, %v1681
      %v1722 = vmul.f32 %v1682, %v1682
      %v1723 = vmul.f32 %v1683, %v1683
      %v1724 = vmul.f32 %v1684, %v1684
      %v1725 = vmul.f32 %v1685, %v1685
      %v1726 = vmul.f32 %v1686, %v1686
      %v1727 = vmul.f32 %v1687, %v1687
      %v1728 = vmul.f32 %v1672, %v1680
      %v1729 = vmul.f32 %v1673, %v1681
      %v1730 = vmul.f32 %v1674, %v1682
      %v1731 = vmul.f32 %v1675, %v1683
      %v1732 = vmul.f32 %v1676, %v1684
      %v1733 = vmul.f32 %v1677, %v1685
      %v1734 = vmul.f32 %v1678, %v1686
      %v1735 = vmul.f32 %v1679, %v1687
      %v1736 = vsub.f32 %v1688, %v1712
      %v1737 = vsub.f32 %v1689, %v1713
      %v1738 = vsub.f32 %v1690, %v1714
      %v1739 = vsub.f32 %v1691, %v1715
      %v1740 = vsub.f32 %v1692, %v1716
      %v1741 = vsub.f32 %v1693, %v1717
      %v1742 = vsub.f32 %v1694, %v1718
      %v1743 = vsub.f32 %v1695, %v1719
      %v1744 = vsub.f32 %v1696, %v1720
      %v1745 = vsub.f32 %v1697, %v1721
      %v1746 = vsub.f32 %v1698, %v1722
      %v1747 = vsub.f32 %v1699, %v1723
      %v1748 = vsub.f32 %v1700, %v1724
      %v1749 = vsub.f32 %v1701, %v1725
      %v1750 = vsub.f32 %v1702, %v1726
      %v1751 = vsub.f32 %v1703, %v1727
      %v1752 = vsub.f32 %v1704, %v1728
      %v1753 = vsub.f32 %v1705, %v1729
      %v1754 = vsub.f32 %v1706, %v1730
      %v1755 = vsub.f32 %v1707, %v1731
      %v1756 = vsub.f32 %v1708, %v1732
      %v1757 = vsub.f32 %v1709, %v1733
      %v1758 = vsub.f32 %v1710, %v1734
      %v1759 = vsub.f32 %v1711, %v1735
      %v1760 = vmul.f32 %v1728, 2.0
      %v1761 = vmul.f32 %v1729, 2.0
      %v1762 = vmul.f32 %v1730, 2.0
      %v1763 = vmul.f32 %v1731, 2.0
      %v1764 = vmul.f32 %v1732, 2.0
      %v1765 = vmul.f32 %v1733, 2.0
      %v1766 = vmul.f32 %v1734, 2.0
      %v1767 = vmul.f32 %v1735, 2.0
      %v1768 = vadd.f32 %v1760, 0.0001
      %v1769 = vadd.f32 %v1761, 0.0001
      %v1770 = vadd.f32 %v1762, 0.0001
      %v1771 = vadd.f32 %v1763, 0.0001
      %v1772 = vadd.f32 %v1764, 0.0001
      %v1773 = vadd.f32 %v1765, 0.0001
      %v1774 = vadd.f32 %v1766, 0.0001
      %v1775 = vadd.f32 %v1767, 0.0001
      %v1776 = vmul.f32 %v1752, 2.0
      %v1777 = vmul.f32 %v1753, 2.0
      %v1778 = vmul.f32 %v1754, 2.0
      %v1779 = vmul.f32 %v1755, 2.0
      %v1780 = vmul.f32 %v1756, 2.0
      %v1781 = vmul.f32 %v1757, 2.0
      %v1782 = vmul.f32 %v1758, 2.0
      %v1783 = vmul.f32 %v1759, 2.0
      %v1784 = vadd.f32 %v1776, 0.0009
      %v1785 = vadd.f32 %v1777, 0.0009
      %v1786 = vadd.f32 %v1778, 0.0009
      %v1787 = vadd.f32 %v1779, 0.0009
      %v1788 = vadd.f32 %v1780, 0.0009
      %v1789 = vadd.f32 %v1781, 0.0009
      %v1790 = vadd.f32 %v1782, 0.0009
      %v1791 = vadd.f32 %v1783, 0.0009
      %v1792 = vmul.f32 %v1768, %v1784
      %v1793 = vmul.f32 %v1769, %v1785
      %v1794 = vmul.f32 %v1770, %v1786
      %v1795 = vmul.f32 %v1771, %v1787
      %v1796 = vmul.f32 %v1772, %v1788
      %v1797 = vmul.f32 %v1773, %v1789
      %v1798 = vmul.f32 %v1774, %v1790
      %v1799 = vmul.f32 %v1775, %v1791
      %v1800 = vadd.f32 %v1712, %v1720
      %v1801 = vadd.f32 %v1713, %v1721
      %v1802 = vadd.f32 %v1714, %v1722
      %v1803 = vadd.f32 %v1715, %v1723
      %v1804 = vadd.f32 %v1716, %v1724
      %v1805 = vadd.f32 %v1717, %v1725
      %v1806 = vadd.f32 %v1718, %v1726
      %v1807 = vadd.f32 %v1719, %v1727
      %v1808 = vadd.f32 %v1800, 0.0001
      %v1809 = vadd.f32 %v1801, 0.0001
      %v1810 = vadd.f32 %v1802, 0.0001
      %v1811 = vadd.f32 %v1803, 0.0001
      %v1812 = vadd.f32 %v1804, 0.0001
      %v1813 = vadd.f32 %v1805, 0.0001
      %v1814 = vadd.f32 %v1806, 0.0001
      %v1815 = vadd.f32 %v1807, 0.0001
      %v1816 = vadd.f32 %v1736, %v1744
      %v1817 = vadd.f32 %v1737, %v1745
      %v1818 = vadd.f32 %v1738, %v1746
      %v1819 = vadd.f32 %v1739, %v1747
      %v1820 = vadd.f32 %v1740, %v1748
      %v1821 = vadd.f32 %v1741, %v1749
      %v1822 = vadd.f32 %v1742, %v1750
      %v1823 = vadd.f32 %v1743, %v1751
      %v1824 = vadd.f32 %v1816, 0.0009
      %v1825 = vadd.f32 %v1817, 0.0009
      %v1826 = vadd.f32 %v1818, 0.0009
      %v1827 = vadd.f32 %v1819, 0.0009
      %v1828 = vadd.f32 %v1820, 0.0009
      %v1829 = vadd.f32 %v1821, 0.0009
      %v1830 = vadd.f32 %v1822, 0.0009
      %v1831 = vadd.f32 %v1823, 0.0009
      %v1832 = vmul.f32 %v1808, %v1824
      %v1833 = vmul.f32 %v1809, %v1825
      %v1834 = vmul.f32 %v1810, %v1826
      %v1835 = vmul.f32 %v1811, %v1827
      %v1836 = vmul.f32 %v1812, %v1828
      %v1837 = vmul.f32 %v1813, %v1829
      %v1838 = vmul.f32 %v1814, %v1830
      %v1839 = vmul.f32 %v1815, %v1831
      %v1840 = vrcp.pop %v1832
      %v1841 = vrcp.pop %v1833
      %v1842 = vrcp.pop %v1834
      %v1843 = vrcp.pop %v1835
      %v1844 = vrcp.pop %v1836
      %v1845 = vrcp.pop %v1837
      %v1846 = vrcp.pop %v1838
      %v1847 = vrcp.pop %v1839
      %v1848 = vmul.f32 %v1832, %v1840
      %v1849 = vmul.f32 %v1833, %v1841
      %v1850 = vmul.f32 %v1834, %v1842
      %v1851 = vmul.f32 %v1835, %v1843
      %v1852 = vmul.f32 %v1836, %v1844
      %v1853 = vmul.f32 %v1837, %v1845
      %v1854 = vmul.f32 %v1838, %v1846
      %v1855 = vmul.f32 %v1839, %v1847
      %v1856 = vsub.f32 2.0, %v1848
      %v1857 = vsub.f32 2.0, %v1849
      %v1858 = vsub.f32 2.0, %v1850
      %v1859 = vsub.f32 2.0, %v1851
      %v1860 = vsub.f32 2.0, %v1852
      %v1861 = vsub.f32 2.0, %v1853
      %v1862 = vsub.f32 2.0, %v1854
      %v1863 = vsub.f32 2.0, %v1855
      %v1864 = vmul.f32 %v1840, %v1856
      %v1865 = vmul.f32 %v1841, %v1857
      %v1866 = vmul.f32 %v1842, %v1858
      %v1867 = vmul.f32 %v1843, %v1859
      %v1868 = vmul.f32 %v1844, %v1860
      %v1869 = vmul.f32 %v1845, %v1861
      %v1870 = vmul.f32 %v1846, %v1862
      %v1871 = vmul.f32 %v1847, %v1863
      %v1872 = vmul.f32 %v1792, %v1864
      %v1873 = vmul.f32 %v1793, %v1865
      %v1874 = vmul.f32 %v1794, %v1866
      %v1875 = vmul.f32 %v1795, %v1867
      %v1876 = vmul.f32 %v1796, %v1868
      %v1877 = vmul.f32 %v1797, %v1869
      %v1878 = vmul.f32 %v1798, %v1870
      %v1879 = vmul.f32 %v1799, %v1871
      %v1880 = vsub.f32 1.0, %v1872
      %v1881 = vsub.f32 1.0, %v1873
      %v1882 = vsub.f32 1.0, %v1874
      %v1883 = vsub.f32 1.0, %v1875
      %v1884 = vsub.f32 1.0, %v1876
      %v1885 = vsub.f32 1.0, %v1877
      %v1886 = vsub.f32 1.0, %v1878
      %v1887 = vsub.f32 1.0, %v1879
      %v1888 = vmul.f32 %v1880, 0.5
      %v1889 = vmul.f32 %v1881, 0.5
      %v1890 = vmul.f32 %v1882, 0.5
      %v1891 = vmul.f32 %v1883, 0.5
      %v1892 = vmul.f32 %v1884, 0.5
      %v1893 = vmul.f32 %v1885, 0.5
      %v1894 = vmul.f32 %v1886, 0.5
      %v1895 = vmul.f32 %v1887, 0.5
      %v1896 = vmax.f32 %v1888, 0.0
      %v1897 = vmax.f32 %v1889, 0.0
      %v1898 = vmax.f32 %v1890, 0.0
      %v1899 = vmax.f32 %v1891, 0.0
      %v1900 = vmax.f32 %v1892, 0.0
      %v1901 = vmax.f32 %v1893, 0.0
      %v1902 = vmax.f32 %v1894, 0.0
      %v1903 = vmax.f32 %v1895, 0.0
      %v1904 = vmin.f32 %v1896, 1.0
      %v1905 = vmin.f32 %v1897, 1.0
      %v1906 = vmin.f32 %v1898, 1.0
      %v1907 = vmin.f32 %v1899, 1.0
      %v1908 = vmin.f32 %v1900, 1.0
      %v1909 = vmin.f32 %v1901, 1.0
      %v1910 = vmin.f32 %v1902, 1.0
      %v1911 = vmin.f32 %v1903, 1.0
      %1912 = vst.msk [vmem:[%s167] sm:$0xff] %vm1286, %v1904
      %1913 = vst.msk [vmem:[%s167 + $0x8] sm:$0xff] %vm1286, %v1905
      %1914 = vst.msk [vmem:[%s167 + $0x10] sm:$0xff] %vm1286, %v1906
      %1915 = vst.msk [vmem:[%s167 + $0x18] sm:$0xff] %vm1286, %v1907
      %1916 = vst.msk [vmem:[%s167 + $0x20] sm:$0xff] %vm1286, %v1908
      %1917 = vst.msk [vmem:[%s167 + $0x28] sm:$0xff] %vm1286, %v1909
      %1918 = vst.msk [vmem:[%s167 + $0x30] sm:$0xff] %vm1286, %v1910
      %1919 = vst.msk [vmem:[%s167 + $0x38] sm:$0xff] %vm1286, %v1911
      %s1920 = smul.u32 8, %s13
      %p1921 = scmp.lt.s32.totalorder %s1920, 15
      %s1922 = scalar_select %p1921, %s1920, 15
      %s1923 = smul.addr %s1922, 8
      %s1924 = scalar_lea.vmem %s2, %s1923
      // Predicated region
      $region29: #{tpu_custom_call.1} parent=27 // pred_check
        %p1925 = pneg %p83
      $region30: #{tpu_custom_call.1} parent=27 // pred_check_branch
        %1927 = sbr.rel (%p1925) target = $region32
      $region31: #{tpu_custom_call.1} parent=27 // pred_region
        %s1928 = smul.u32 8, %s13
      $region32: #{tpu_custom_call.1} parent=27 // pred_fallthru
        _
    $region28: #{tpu_custom_call.1} parent=5 // pred_fallthru
      _
    %p1929 = scmp.le.s32.totalorder 2, %s8
    // Predicated region
    $region33: #{tpu_custom_call.1} parent=5 // pred_check
      %p1930 = pneg %p1929
    $region34: #{tpu_custom_call.1} parent=5 // pred_check_branch
      %1932 = sbr.rel (%p1930) target = $region36
    $region35: #{tpu_custom_call.1} parent=5 // pred_region
      %s1933 = ssub.s32 %s8, 2
      // Predicated region
      $region37: #{tpu_custom_call.1} parent=35 // pred_check
        %p1934 = pneg %p89
      $region38: #{tpu_custom_call.1} parent=35 // pred_check_branch
        %1936 = sbr.rel (%p1934) target = $region40
      $region39: #{tpu_custom_call.1} parent=35 // pred_region
        %s1937 = smul.u32 8, %s14
        %p1938 = scmp.lt.s32.totalorder %s1937, 15
        %s1939 = scalar_select %p1938, %s1937, 15
        %s1940 = smul.addr %s1939, 8
        %s1941 = scalar_lea.vmem %s2, %s1940
      $region40: #{tpu_custom_call.1} parent=35 // pred_fallthru
        _
    $region36: #{tpu_custom_call.1} parent=5 // pred_fallthru
      _
  $region6: #{tpu_custom_call.1} parent=0 // loop_footer
    %s12 = sadd.s32 1, %s8
  $region7: #{tpu_custom_call.1} parent=0 // loop_footer_branch
    %7 = sbr.rel target = $region3
  $region8: #{tpu_custom_call.1} parent=0 // loop_exit
    _

</llo_original>
